<compile_context>
chip_gen: v6e
topology: v6e:2x2x1
jax: 0.10.0
libtpu: 0.0.40
codegen_flags: <defaults>
</compile_context>

<pallas_src>
import functools

import jax
import jax.numpy as jnp
from jax.experimental import pallas as pl
from jax.experimental.pallas import tpu as pltpu


def _round_up(n, m):
    return (n + m - 1) // m * m


def _fcc_kernel(x_ref, w1_ref, b1_ref, w2_ref, b2_ref, w3_ref, b3_ref, o_ref,
                *, n_cls):
    # Whole hot path fused: 3 matmuls + sigmoids + masked log_softmax.
    x = x_ref[...]

    h1 = jax.nn.sigmoid(
        jnp.dot(x, w1_ref[...], preferred_element_type=jnp.float32) + b1_ref[...])
    h2 = jax.nn.sigmoid(
        jnp.dot(h1, w2_ref[...], preferred_element_type=jnp.float32) + b2_ref[...])
    logits = jnp.dot(h2, w3_ref[...], preferred_element_type=jnp.float32) + b3_ref[...]

    # Class dim is zero-padded to a lane-dense 128; mask padded lanes so the
    # log_softmax normalization only sees the real n_cls classes.
    lane = jax.lax.broadcasted_iota(jnp.int32, logits.shape, 1)
    logits = jnp.where(lane < n_cls, logits, -jnp.inf)

    m = jnp.max(logits, axis=-1, keepdims=True)
    shifted = logits - m
    lse = jnp.log(jnp.sum(jnp.exp(shifted), axis=-1, keepdims=True))
    o_ref[...] = shifted - lse


def _call(x_p, w1_p, b1, w2, b2, w3_p, b3_p, *, bt, n_cls, single_buffer_weights):
    B_pad, in_dim_p = x_p.shape
    u1 = w1_p.shape[1]
    u2 = w2.shape[1]
    n_cls_p = w3_p.shape[1]
    grid = (B_pad // bt,)

    if single_buffer_weights:
        # Constant index_map -> no need for double buffering of resident weights.
        def wspec(shape):
            return pl.BlockSpec(shape, lambda i: (0, 0), pipeline_mode=pl.Buffered(1))
    else:
        def wspec(shape):
            return pl.BlockSpec(shape, lambda i: (0, 0))

    return pl.pallas_call(
        functools.partial(_fcc_kernel, n_cls=n_cls),
        out_shape=jax.ShapeDtypeStruct((B_pad, n_cls_p), jnp.float32),
        grid_spec=pltpu.PrefetchScalarGridSpec(
            num_scalar_prefetch=0,
            grid=grid,
            in_specs=[
                pl.BlockSpec((bt, in_dim_p), lambda i: (i, 0)),  # x tile (varies)
                wspec((in_dim_p, u1)),                           # W1 (resident)
                wspec((1, u1)),                                  # b1
                wspec((u1, u2)),                                 # W2
                wspec((1, u2)),                                  # b2
                wspec((u2, n_cls_p)),                            # W3 (lane-padded)
                wspec((1, n_cls_p)),                             # b3 (lane-padded)
            ],
            out_specs=pl.BlockSpec((bt, n_cls_p), lambda i: (i, 0)),
        ),
        compiler_params=pltpu.CompilerParams(
            dimension_semantics=("parallel",),
            vmem_limit_bytes=32 * 1024 * 1024,
        ),
    )(x_p, w1_p, b1, w2, b2, w3_p, b3_p)


def fcc_sigmoid_forward(x, params, *, batch_tile=256, cast_bf16=False):
    """x: (B, 1, 28, 28) or (B, 784) float32.  Returns (B, 10) log-probs."""
    w1, b1, w2, b2, w3, b3 = params
    B = x.shape[0]
    x2d = x.reshape(B, -1).astype(jnp.float32)      # x.view(x.size(0), -1)
    in_dim = x2d.shape[1]
    n_cls = w3.shape[1]

    # --- padding for TPU-friendly layouts -----------------------------------
    in_dim_p = _round_up(in_dim, 128)               # 784 -> 896 (exact: zero W1 rows)
    n_cls_p = _round_up(n_cls, 128)                 # 10 -> 128 (lane-dense stores)
    min_rows = 16 if cast_bf16 else 8               # sublane packing for bf16
    bt = _round_up(min(batch_tile, _round_up(B, min_rows)), min_rows)
    B_pad = _round_up(B, bt)

    x_p = jnp.pad(x2d, ((0, B_pad - B), (0, in_dim_p - in_dim)))
    w1_p = jnp.pad(w1, ((0, in_dim_p - in_dim), (0, 0)))
    w3_p = jnp.pad(w3, ((0, 0), (0, n_cls_p - n_cls)))
    b3_p = jnp.pad(b3, ((0, 0), (0, n_cls_p - n_cls)))

    if cast_bf16:
        # Halve the dominant HBM stream (the x read); accumulation stays f32.
        x_p = x_p.astype(jnp.bfloat16)
        w1_p = w1_p.astype(jnp.bfloat16)

    try:
        out_p = _call(x_p, w1_p, b1, w2, b2, w3_p, b3_p,
                      bt=bt, n_cls=n_cls, single_buffer_weights=True)
    except Exception:
        # Fallback if pipeline_mode=pl.Buffered(1) is unsupported in this build.
        out_p = _call(x_p, w1_p, b1, w2, b2, w3_p, b3_p,
                      bt=bt, n_cls=n_cls, single_buffer_weights=False)

    return out_p[:B, :n_cls]


def init_params(key, units, in_dim=28 * 28, n_cls=10):
    """Deterministic synthetic parameters matching nn.Linear shapes.
    Stored as (in, out) so the kernel computes x @ W + b."""
    u1, u2 = units
    k = jax.random.split(key, 6)

    def lin(kw, kb, fan_in, fan_out):
        bound = 1.0 / jnp.sqrt(fan_in)
        w = jax.random.uniform(kw, (fan_in, fan_out), jnp.float32, -bound, bound)
        b = jax.random.uniform(kb, (1, fan_out), jnp.float32, -bound, bound)
        return w, b

    w1, b1 = lin(k[0], k[1], in_dim, u1)
    w2, b2 = lin(k[2], k[3], u1, u2)
    w3, b3 = lin(k[4], k[5], u2, n_cls)
    return (w1, b1, w2, b2, w3, b3)


def _reference(x, params):
    w1, b1, w2, b2, w3, b3 = params
    x2d = x.reshape(x.shape[0], -1)
    h1 = jax.nn.sigmoid(x2d @ w1 + b1)
    h2 = jax.nn.sigmoid(h1 @ w2 + b2)
    return jax.nn.log_softmax(h2 @ w3 + b3, axis=1)


if __name__ == "__main__":
    key = jax.random.PRNGKey(0)
    k_param, k_x = jax.random.split(key)

    units = [32, 32]
    B = 8
    params = init_params(k_param, units)
    x = jax.random.normal(k_x, (B, 1, 28, 28), jnp.float32)

    ref = _reference(x, params)

    # Exact f32 path (matches PyTorch semantics).
    out = jax.block_until_ready(fcc_sigmoid_forward(x, params))
    assert out.shape == (B, 10)
    assert jnp.allclose(out, ref, atol=1e-5, rtol=1e-5), "f32 mismatch vs reference"

    # Optional bf16-input path (halves the dominant HBM stream on large batches).
    out_bf16 = jax.block_until_ready(fcc_sigmoid_forward(x, params, cast_bf16=True))
    assert out_bf16.shape == (B, 10)
    assert jnp.allclose(out_bf16, ref, atol=5e-2, rtol=5e-2), "bf16 mismatch vs reference"

    print("KERNEL_OK")
</pallas_src>

<mosaic_0001>
module attributes {stable_mosaic.version = 11 : i64} {
  func.func @_fcc_kernel(%arg0: i32, %arg1: memref<8x896xf32, #tpu.memory_space<vmem>>, %arg2: memref<896x32xf32, #tpu.memory_space<vmem>>, %arg3: memref<1x32xf32, #tpu.memory_space<vmem>>, %arg4: memref<32x32xf32, #tpu.memory_space<vmem>>, %arg5: memref<1x32xf32, #tpu.memory_space<vmem>>, %arg6: memref<32x128xf32, #tpu.memory_space<vmem>>, %arg7: memref<1x128xf32, #tpu.memory_space<vmem>>, %arg8: memref<8x128xf32, #tpu.memory_space<vmem>>) attributes {dimension_semantics = [#tpu.dimension_semantics<parallel>], iteration_bounds = array<i64: 1>, scalar_prefetch = 0 : i64, scratch_operands = 0 : i64, tpu.core_type = #tpu.core_type<tc>, window_params = [{transform_indices = @transform_0, window_bounds = array<i64: 8, 896>}, {pipeline_mode = #tpu.pipeline_mode<synchronous>, transform_indices = @transform_1, window_bounds = array<i64: 896, 32>}, {pipeline_mode = #tpu.pipeline_mode<synchronous>, transform_indices = @transform_2, window_bounds = array<i64: 1, 32>}, {pipeline_mode = #tpu.pipeline_mode<synchronous>, transform_indices = @transform_3, window_bounds = array<i64: 32, 32>}, {pipeline_mode = #tpu.pipeline_mode<synchronous>, transform_indices = @transform_4, window_bounds = array<i64: 1, 32>}, {pipeline_mode = #tpu.pipeline_mode<synchronous>, transform_indices = @transform_5, window_bounds = array<i64: 32, 128>}, {pipeline_mode = #tpu.pipeline_mode<synchronous>, transform_indices = @transform_6, window_bounds = array<i64: 1, 128>}, {transform_indices = @transform_7, window_bounds = array<i64: 8, 128>}]} {
    %c0 = arith.constant 0 : index
    %c0_0 = arith.constant 0 : index
    %0 = vector.load %arg1[%c0, %c0_0] : memref<8x896xf32, #tpu.memory_space<vmem>>, vector<8x896xf32>
    %c0_1 = arith.constant 0 : index
    %c0_2 = arith.constant 0 : index
    %1 = vector.load %arg2[%c0_1, %c0_2] : memref<896x32xf32, #tpu.memory_space<vmem>>, vector<896x32xf32>
    %cst = arith.constant dense<0.000000e+00> : vector<8x32xf32>
    %2 = tpu.matmul %0, %1, %cst {dimension_numbers = #tpu.dot_dimension_numbers<[1], [0], [0], [1], [0, 0, 1, 1], [], []>} : vector<8x896xf32>, vector<896x32xf32>, vector<8x32xf32> -> vector<8x32xf32>
    %c0_3 = arith.constant 0 : index
    %c0_4 = arith.constant 0 : index
    %3 = vector.load %arg3[%c0_3, %c0_4] : memref<1x32xf32, #tpu.memory_space<vmem>>, vector<1x32xf32>
    %4 = vector.broadcast %3 : vector<1x32xf32> to vector<8x32xf32>
    %5 = arith.addf %2, %4 : vector<8x32xf32>
    %6 = arith.negf %5 : vector<8x32xf32>
    %7 = math.exp %6 : vector<8x32xf32>
    %cst_5 = arith.constant 1.000000e+00 : f32
    %8 = vector.broadcast %cst_5 : f32 to vector<8x32xf32>
    %9 = arith.addf %8, %7 : vector<8x32xf32>
    %10 = arith.divf %8, %9 : vector<8x32xf32>
    %c0_6 = arith.constant 0 : index
    %c0_7 = arith.constant 0 : index
    %11 = vector.load %arg4[%c0_6, %c0_7] : memref<32x32xf32, #tpu.memory_space<vmem>>, vector<32x32xf32>
    %cst_8 = arith.constant dense<0.000000e+00> : vector<8x32xf32>
    %12 = tpu.matmul %10, %11, %cst_8 {dimension_numbers = #tpu.dot_dimension_numbers<[1], [0], [0], [1], [0, 0, 1, 1], [], []>} : vector<8x32xf32>, vector<32x32xf32>, vector<8x32xf32> -> vector<8x32xf32>
    %c0_9 = arith.constant 0 : index
    %c0_10 = arith.constant 0 : index
    %13 = vector.load %arg5[%c0_9, %c0_10] : memref<1x32xf32, #tpu.memory_space<vmem>>, vector<1x32xf32>
    %14 = vector.broadcast %13 : vector<1x32xf32> to vector<8x32xf32>
    %15 = arith.addf %12, %14 : vector<8x32xf32>
    %16 = arith.negf %15 : vector<8x32xf32>
    %17 = math.exp %16 : vector<8x32xf32>
    %cst_11 = arith.constant 1.000000e+00 : f32
    %18 = vector.broadcast %cst_11 : f32 to vector<8x32xf32>
    %19 = arith.addf %18, %17 : vector<8x32xf32>
    %20 = arith.divf %18, %19 : vector<8x32xf32>
    %c0_12 = arith.constant 0 : index
    %c0_13 = arith.constant 0 : index
    %21 = vector.load %arg6[%c0_12, %c0_13] : memref<32x128xf32, #tpu.memory_space<vmem>>, vector<32x128xf32>
    %cst_14 = arith.constant dense<0.000000e+00> : vector<8x128xf32>
    %22 = tpu.matmul %20, %21, %cst_14 {dimension_numbers = #tpu.dot_dimension_numbers<[1], [0], [0], [1], [0, 0, 1, 1], [], []>} : vector<8x32xf32>, vector<32x128xf32>, vector<8x128xf32> -> vector<8x128xf32>
    %c0_15 = arith.constant 0 : index
    %c0_16 = arith.constant 0 : index
    %23 = vector.load %arg7[%c0_15, %c0_16] : memref<1x128xf32, #tpu.memory_space<vmem>>, vector<1x128xf32>
    %24 = vector.broadcast %23 : vector<1x128xf32> to vector<8x128xf32>
    %25 = arith.addf %22, %24 : vector<8x128xf32>
    %26 = tpu.iota {dimensions = array<i32: 1>} : vector<8x128xi32>
    %c10_i32 = arith.constant 10 : i32
    %27 = vector.broadcast %c10_i32 : i32 to vector<8x128xi32>
    %28 = arith.cmpi slt, %26, %27 : vector<8x128xi32>
    %cst_17 = arith.constant 0xFF800000 : f32
    %29 = vector.broadcast %cst_17 : f32 to vector<8x128xf32>
    %30 = arith.select %28, %25, %29 : vector<8x128xi1>, vector<8x128xf32>
    %cst_18 = arith.constant dense<0xFF800000> : vector<8xf32>
    %31 = vector.multi_reduction <maximumf>, %30, %cst_18 [1] : vector<8x128xf32> to vector<8xf32>
    %32 = vector.shape_cast %31 : vector<8xf32> to vector<8x1xf32>
    %33 = vector.broadcast %32 : vector<8x1xf32> to vector<8x128xf32>
    %34 = arith.subf %30, %33 : vector<8x128xf32>
    %35 = math.exp %34 : vector<8x128xf32>
    %cst_19 = arith.constant dense<0.000000e+00> : vector<8xf32>
    %36 = vector.multi_reduction <add>, %35, %cst_19 [1] : vector<8x128xf32> to vector<8xf32>
    %37 = vector.shape_cast %36 : vector<8xf32> to vector<8x1xf32>
    %38 = math.log %37 : vector<8x1xf32>
    %39 = vector.broadcast %38 : vector<8x1xf32> to vector<8x128xf32>
    %40 = arith.subf %34, %39 : vector<8x128xf32>
    %c0_20 = arith.constant 0 : index
    %c0_21 = arith.constant 0 : index
    %41 = vector.load %arg8[%c0_20, %c0_21] : memref<8x128xf32, #tpu.memory_space<vmem>>, vector<8x128xf32>
    tpu.vector_store %arg8[%c0_20, %c0_21], %40 {strides = array<i32>} : memref<8x128xf32, #tpu.memory_space<vmem>>, vector<8x128xf32>,
    return
  }
  func.func @transform_0(%arg0: i32) -> (i32, i32) {
    %c0_i32 = arith.constant 0 : i32
    %c0_i32_0 = arith.constant 0 : i32
    return %arg0, %c0_i32 : i32, i32
  }
  func.func @transform_1(%arg0: i32) -> (i32, i32) {
    %c0_i32 = arith.constant 0 : i32
    %c0_i32_0 = arith.constant 0 : i32
    %c0_i32_1 = arith.constant 0 : i32
    return %c0_i32, %c0_i32_0 : i32, i32
  }
  func.func @transform_2(%arg0: i32) -> (i32, i32) {
    %c0_i32 = arith.constant 0 : i32
    %c0_i32_0 = arith.constant 0 : i32
    %c0_i32_1 = arith.constant 0 : i32
    return %c0_i32, %c0_i32_0 : i32, i32
  }
  func.func @transform_3(%arg0: i32) -> (i32, i32) {
    %c0_i32 = arith.constant 0 : i32
    %c0_i32_0 = arith.constant 0 : i32
    %c0_i32_1 = arith.constant 0 : i32
    return %c0_i32, %c0_i32_0 : i32, i32
  }
  func.func @transform_4(%arg0: i32) -> (i32, i32) {
    %c0_i32 = arith.constant 0 : i32
    %c0_i32_0 = arith.constant 0 : i32
    %c0_i32_1 = arith.constant 0 : i32
    return %c0_i32, %c0_i32_0 : i32, i32
  }
  func.func @transform_5(%arg0: i32) -> (i32, i32) {
    %c0_i32 = arith.constant 0 : i32
    %c0_i32_0 = arith.constant 0 : i32
    %c0_i32_1 = arith.constant 0 : i32
    return %c0_i32, %c0_i32_0 : i32, i32
  }
  func.func @transform_6(%arg0: i32) -> (i32, i32) {
    %c0_i32 = arith.constant 0 : i32
    %c0_i32_0 = arith.constant 0 : i32
    %c0_i32_1 = arith.constant 0 : i32
    return %c0_i32, %c0_i32_0 : i32, i32
  }
  func.func @transform_7(%arg0: i32) -> (i32, i32) {
    %c0_i32 = arith.constant 0 : i32
    %c0_i32_0 = arith.constant 0 : i32
    return %arg0, %c0_i32 : i32, i32
  }
}

module attributes {stable_mosaic.version = 11 : i64} {
  func.func @_fcc_kernel(%arg0: i32, %arg1: memref<8x896xf32, #tpu.memory_space<vmem>>, %arg2: memref<896x32xf32, #tpu.memory_space<vmem>>, %arg3: memref<1x32xf32, #tpu.memory_space<vmem>>, %arg4: memref<32x32xf32, #tpu.memory_space<vmem>>, %arg5: memref<1x32xf32, #tpu.memory_space<vmem>>, %arg6: memref<32x128xf32, #tpu.memory_space<vmem>>, %arg7: memref<1x128xf32, #tpu.memory_space<vmem>>, %arg8: memref<8x128xf32, #tpu.memory_space<vmem>>) attributes {dimension_semantics = [#tpu.dimension_semantics<parallel>], iteration_bounds = array<i64: 1>, scalar_prefetch = 0 : i64, scratch_operands = 0 : i64, tpu.core_type = #tpu.core_type<tc>, window_params = [{transform_indices = @transform_0, window_bounds = array<i64: 8, 896>}, {pipeline_mode = #tpu.pipeline_mode<synchronous>, transform_indices = @transform_1, window_bounds = array<i64: 896, 32>}, {pipeline_mode = #tpu.pipeline_mode<synchronous>, transform_indices = @transform_2, window_bounds = array<i64: 1, 32>}, {pipeline_mode = #tpu.pipeline_mode<synchronous>, transform_indices = @transform_3, window_bounds = array<i64: 32, 32>}, {pipeline_mode = #tpu.pipeline_mode<synchronous>, transform_indices = @transform_4, window_bounds = array<i64: 1, 32>}, {pipeline_mode = #tpu.pipeline_mode<synchronous>, transform_indices = @transform_5, window_bounds = array<i64: 32, 128>}, {pipeline_mode = #tpu.pipeline_mode<synchronous>, transform_indices = @transform_6, window_bounds = array<i64: 1, 128>}, {transform_indices = @transform_7, window_bounds = array<i64: 8, 128>}]} {
    %c0 = arith.constant 0 : index
    %c0_0 = arith.constant 0 : index
    %0 = vector.load %arg1[%c0, %c0_0] : memref<8x896xf32, #tpu.memory_space<vmem>>, vector<8x896xf32>
    %c0_1 = arith.constant 0 : index
    %c0_2 = arith.constant 0 : index
    %1 = vector.load %arg2[%c0_1, %c0_2] : memref<896x32xf32, #tpu.memory_space<vmem>>, vector<896x32xf32>
    %cst = arith.constant dense<0.000000e+00> : vector<8x32xf32>
    %2 = tpu.matmul %0, %1, %cst {dimension_numbers = #tpu.dot_dimension_numbers<[1], [0], [0], [1], [0, 0, 1, 1], [], []>} : vector<8x896xf32>, vector<896x32xf32>, vector<8x32xf32> -> vector<8x32xf32>
    %c0_3 = arith.constant 0 : index
    %c0_4 = arith.constant 0 : index
    %3 = vector.load %arg3[%c0_3, %c0_4] : memref<1x32xf32, #tpu.memory_space<vmem>>, vector<1x32xf32>
    %4 = vector.broadcast %3 : vector<1x32xf32> to vector<8x32xf32>
    %5 = arith.addf %2, %4 : vector<8x32xf32>
    %6 = arith.negf %5 : vector<8x32xf32>
    %7 = math.exp %6 : vector<8x32xf32>
    %cst_5 = arith.constant 1.000000e+00 : f32
    %8 = vector.broadcast %cst_5 : f32 to vector<8x32xf32>
    %9 = arith.addf %8, %7 : vector<8x32xf32>
    %10 = arith.divf %8, %9 : vector<8x32xf32>
    %c0_6 = arith.constant 0 : index
    %c0_7 = arith.constant 0 : index
    %11 = vector.load %arg4[%c0_6, %c0_7] : memref<32x32xf32, #tpu.memory_space<vmem>>, vector<32x32xf32>
    %cst_8 = arith.constant dense<0.000000e+00> : vector<8x32xf32>
    %12 = tpu.matmul %10, %11, %cst_8 {dimension_numbers = #tpu.dot_dimension_numbers<[1], [0], [0], [1], [0, 0, 1, 1], [], []>} : vector<8x32xf32>, vector<32x32xf32>, vector<8x32xf32> -> vector<8x32xf32>
    %c0_9 = arith.constant 0 : index
    %c0_10 = arith.constant 0 : index
    %13 = vector.load %arg5[%c0_9, %c0_10] : memref<1x32xf32, #tpu.memory_space<vmem>>, vector<1x32xf32>
    %14 = vector.broadcast %13 : vector<1x32xf32> to vector<8x32xf32>
    %15 = arith.addf %12, %14 : vector<8x32xf32>
    %16 = arith.negf %15 : vector<8x32xf32>
    %17 = math.exp %16 : vector<8x32xf32>
    %cst_11 = arith.constant 1.000000e+00 : f32
    %18 = vector.broadcast %cst_11 : f32 to vector<8x32xf32>
    %19 = arith.addf %18, %17 : vector<8x32xf32>
    %20 = arith.divf %18, %19 : vector<8x32xf32>
    %c0_12 = arith.constant 0 : index
    %c0_13 = arith.constant 0 : index
    %21 = vector.load %arg6[%c0_12, %c0_13] : memref<32x128xf32, #tpu.memory_space<vmem>>, vector<32x128xf32>
    %cst_14 = arith.constant dense<0.000000e+00> : vector<8x128xf32>
    %22 = tpu.matmul %20, %21, %cst_14 {dimension_numbers = #tpu.dot_dimension_numbers<[1], [0], [0], [1], [0, 0, 1, 1], [], []>} : vector<8x32xf32>, vector<32x128xf32>, vector<8x128xf32> -> vector<8x128xf32>
    %c0_15 = arith.constant 0 : index
    %c0_16 = arith.constant 0 : index
    %23 = vector.load %arg7[%c0_15, %c0_16] : memref<1x128xf32, #tpu.memory_space<vmem>>, vector<1x128xf32>
    %24 = vector.broadcast %23 : vector<1x128xf32> to vector<8x128xf32>
    %25 = arith.addf %22, %24 : vector<8x128xf32>
    %26 = tpu.iota {dimensions = array<i32: 1>} : vector<8x128xi32>
    %c10_i32 = arith.constant 10 : i32
    %27 = vector.broadcast %c10_i32 : i32 to vector<8x128xi32>
    %28 = arith.cmpi slt, %26, %27 : vector<8x128xi32>
    %cst_17 = arith.constant 0xFF800000 : f32
    %29 = vector.broadcast %cst_17 : f32 to vector<8x128xf32>
    %30 = arith.select %28, %25, %29 : vector<8x128xi1>, vector<8x128xf32>
    %cst_18 = arith.constant dense<0xFF800000> : vector<8xf32>
    %31 = vector.multi_reduction <maximumf>, %30, %cst_18 [1] : vector<8x128xf32> to vector<8xf32>
    %32 = vector.shape_cast %31 : vector<8xf32> to vector<8x1xf32>
    %33 = vector.broadcast %32 : vector<8x1xf32> to vector<8x128xf32>
    %34 = arith.subf %30, %33 : vector<8x128xf32>
    %35 = math.exp %34 : vector<8x128xf32>
    %cst_19 = arith.constant dense<0.000000e+00> : vector<8xf32>
    %36 = vector.multi_reduction <add>, %35, %cst_19 [1] : vector<8x128xf32> to vector<8xf32>
    %37 = vector.shape_cast %36 : vector<8xf32> to vector<8x1xf32>
    %38 = math.log %37 : vector<8x1xf32>
    %39 = vector.broadcast %38 : vector<8x1xf32> to vector<8x128xf32>
    %40 = arith.subf %34, %39 : vector<8x128xf32>
    %c0_20 = arith.constant 0 : index
    %c0_21 = arith.constant 0 : index
    %41 = vector.load %arg8[%c0_20, %c0_21] : memref<8x128xf32, #tpu.memory_space<vmem>>, vector<8x128xf32>
    tpu.vector_store %arg8[%c0_20, %c0_21], %40 {strides = array<i32>} : memref<8x128xf32, #tpu.memory_space<vmem>>, vector<8x128xf32>,
    return
  }
  func.func @transform_0(%arg0: i32) -> (i32, i32) {
    %c0_i32 = arith.constant 0 : i32
    %c0_i32_0 = arith.constant 0 : i32
    return %arg0, %c0_i32 : i32, i32
  }
  func.func @transform_1(%arg0: i32) -> (i32, i32) {
    %c0_i32 = arith.constant 0 : i32
    %c0_i32_0 = arith.constant 0 : i32
    %c0_i32_1 = arith.constant 0 : i32
    return %c0_i32, %c0_i32_0 : i32, i32
  }
  func.func @transform_2(%arg0: i32) -> (i32, i32) {
    %c0_i32 = arith.constant 0 : i32
    %c0_i32_0 = arith.constant 0 : i32
    %c0_i32_1 = arith.constant 0 : i32
    return %c0_i32, %c0_i32_0 : i32, i32
  }
  func.func @transform_3(%arg0: i32) -> (i32, i32) {
    %c0_i32 = arith.constant 0 : i32
    %c0_i32_0 = arith.constant 0 : i32
    %c0_i32_1 = arith.constant 0 : i32
    return %c0_i32, %c0_i32_0 : i32, i32
  }
  func.func @transform_4(%arg0: i32) -> (i32, i32) {
    %c0_i32 = arith.constant 0 : i32
    %c0_i32_0 = arith.constant 0 : i32
    %c0_i32_1 = arith.constant 0 : i32
    return %c0_i32, %c0_i32_0 : i32, i32
  }
  func.func @transform_5(%arg0: i32) -> (i32, i32) {
    %c0_i32 = arith.constant 0 : i32
    %c0_i32_0 = arith.constant 0 : i32
    %c0_i32_1 = arith.constant 0 : i32
    return %c0_i32, %c0_i32_0 : i32, i32
  }
  func.func @transform_6(%arg0: i32) -> (i32, i32) {
    %c0_i32 = arith.constant 0 : i32
    %c0_i32_0 = arith.constant 0 : i32
    %c0_i32_1 = arith.constant 0 : i32
    return %c0_i32, %c0_i32_0 : i32, i32
  }
  func.func @transform_7(%arg0: i32) -> (i32, i32) {
    %c0_i32 = arith.constant 0 : i32
    %c0_i32_0 = arith.constant 0 : i32
    return %arg0, %c0_i32 : i32, i32
  }
}

</mosaic_0001>

<llo_original>
// kernel: tpu_custom_call.1
$region0: #{tpu_custom_call.1}
  #allocation0 [shape = 'u32[]', space=smem, size = 0x4, offset = 0x4, fixed_abs, tag = 'smem constant byte address 0x4 - core index']
  #allocation1 [shape = 'u32[144,128]{1,0:T(1,128)}', space=vmem, size = 0x12000, scoped, tag = 'internal scratch']
  %s0 = inlined_call_operand.vmem [shape: f32[8,896], index: 0, kind: input, shape index: {}]
  %s1 = inlined_call_operand.vmem [shape: f32[896,32], index: 1, kind: input, shape index: {}]
  %s2 = inlined_call_operand.vmem [shape: f32[1,32], index: 2, kind: input, shape index: {}]
  %s3 = inlined_call_operand.vmem [shape: f32[32,32], index: 3, kind: input, shape index: {}]
  %s4 = inlined_call_operand.vmem [shape: f32[1,32], index: 4, kind: input, shape index: {}]
  %s5 = inlined_call_operand.vmem [shape: f32[32,128], index: 5, kind: input, shape index: {}]
  %s6 = inlined_call_operand.vmem [shape: f32[1,128], index: 6, kind: input, shape index: {}]
  %s7 = inlined_call_operand.hbm [shape: f32[8,128], index: 7, kind: output, shape index: {}]
  %s8 = sld [smem:[#allocation0]]
  $region38: #{tpu_custom_call.1} parent=0
    _
  %s10 = ssub.s32 1, %s8
  %s11 = scalar_select 0, %s10, %s8
  $region1: #{tpu_custom_call.1} parent=0
    #allocation2 [shape = 'u8[4096]{0}', space=vmem, size = 0x1000, scoped, tag = 'output window, operand 0, single buffered']
    #allocation3 [shape = 's32[1]{0}', space=sflag, size = 0x4, scoped, tag = 'scoped memory for tpu_custom_call.1']
    %12 = vsyncpa [#allocation3], 0
    // Predicated region
    $region2: #{tpu_custom_call.1} parent=1 // pred_check
      _
    $region3: #{tpu_custom_call.1} parent=1 // pred_check_branch
      %14 = sbr.rel (0) target = $region5
    $region4: #{tpu_custom_call.1} parent=1 // pred_region
      _
    $region5: #{tpu_custom_call.1} parent=1 // pred_fallthru
      _
    // Predicated region
    $region6: #{tpu_custom_call.1} parent=1 // pred_check
      _
    $region7: #{tpu_custom_call.1} parent=1 // pred_check_branch
      %16 = sbr.rel (0) target = $region9
    $region8: #{tpu_custom_call.1} parent=1 // pred_region
      _
    $region9: #{tpu_custom_call.1} parent=1 // pred_fallthru
      _
    // Predicated region
    $region10: #{tpu_custom_call.1} parent=1 // pred_check
      _
    $region11: #{tpu_custom_call.1} parent=1 // pred_check_branch
      %18 = sbr.rel (0) target = $region13
    $region12: #{tpu_custom_call.1} parent=1 // pred_region
      _
    $region13: #{tpu_custom_call.1} parent=1 // pred_fallthru
      _
    // Predicated region
    $region14: #{tpu_custom_call.1} parent=1 // pred_check
      _
    $region15: #{tpu_custom_call.1} parent=1 // pred_check_branch
      %20 = sbr.rel (0) target = $region17
    $region16: #{tpu_custom_call.1} parent=1 // pred_region
      _
    $region17: #{tpu_custom_call.1} parent=1 // pred_fallthru
      _
    // Predicated region
    $region18: #{tpu_custom_call.1} parent=1 // pred_check
      _
    $region19: #{tpu_custom_call.1} parent=1 // pred_check_branch
      %22 = sbr.rel (0) target = $region21
    $region20: #{tpu_custom_call.1} parent=1 // pred_region
      _
    $region21: #{tpu_custom_call.1} parent=1 // pred_fallthru
      _
    // Predicated region
    $region22: #{tpu_custom_call.1} parent=1 // pred_check
      _
    $region23: #{tpu_custom_call.1} parent=1 // pred_check_branch
      %24 = sbr.rel (0) target = $region25
    $region24: #{tpu_custom_call.1} parent=1 // pred_region
      _
    $region25: #{tpu_custom_call.1} parent=1 // pred_fallthru
      _
    // Predicated region
    $region26: #{tpu_custom_call.1} parent=1 // pred_check
      _
    $region27: #{tpu_custom_call.1} parent=1 // pred_check_branch
      %26 = sbr.rel (0) target = $region29
    $region28: #{tpu_custom_call.1} parent=1 // pred_region
      _
    $region29: #{tpu_custom_call.1} parent=1 // pred_fallthru
      _
    %v27 = vld [vmem:[%s0] sm:$0xff]
    %v28 = vld [vmem:[%s0 + $0x8] sm:$0xff]
    %v29 = vld [vmem:[%s0 + $0x10] sm:$0xff]
    %v30 = vld [vmem:[%s0 + $0x18] sm:$0xff]
    %v31 = vld [vmem:[%s0 + $0x20] sm:$0xff]
    %v32 = vld [vmem:[%s0 + $0x28] sm:$0xff]
    %v33 = vld [vmem:[%s0 + $0x30] sm:$0xff]
    %v34 = vld [vmem:[%s1] sm:$0xff]
    %v35 = vld [vmem:[%s1 + $0x8] sm:$0xff]
    %v36 = vld [vmem:[%s1 + $0x10] sm:$0xff]
    %v37 = vld [vmem:[%s1 + $0x18] sm:$0xff]
    %v38 = vld [vmem:[%s1 + $0x20] sm:$0xff]
    %v39 = vld [vmem:[%s1 + $0x28] sm:$0xff]
    %v40 = vld [vmem:[%s1 + $0x30] sm:$0xff]
    %v41 = vld [vmem:[%s1 + $0x38] sm:$0xff]
    %v42 = vld [vmem:[%s1 + $0x40] sm:$0xff]
    %v43 = vld [vmem:[%s1 + $0x48] sm:$0xff]
    %v44 = vld [vmem:[%s1 + $0x50] sm:$0xff]
    %v45 = vld [vmem:[%s1 + $0x58] sm:$0xff]
    %v46 = vld [vmem:[%s1 + $0x60] sm:$0xff]
    %v47 = vld [vmem:[%s1 + $0x68] sm:$0xff]
    %v48 = vld [vmem:[%s1 + $0x70] sm:$0xff]
    %v49 = vld [vmem:[%s1 + $0x78] sm:$0xff]
    %v50 = vld [vmem:[%s1 + $0x80] sm:$0xff]
    %v51 = vld [vmem:[%s1 + $0x88] sm:$0xff]
    %v52 = vld [vmem:[%s1 + $0x90] sm:$0xff]
    %v53 = vld [vmem:[%s1 + $0x98] sm:$0xff]
    %v54 = vld [vmem:[%s1 + $0xa0] sm:$0xff]
    %v55 = vld [vmem:[%s1 + $0xa8] sm:$0xff]
    %v56 = vld [vmem:[%s1 + $0xb0] sm:$0xff]
    %v57 = vld [vmem:[%s1 + $0xb8] sm:$0xff]
    %v58 = vld [vmem:[%s1 + $0xc0] sm:$0xff]
    %v59 = vld [vmem:[%s1 + $0xc8] sm:$0xff]
    %v60 = vld [vmem:[%s1 + $0xd0] sm:$0xff]
    %v61 = vld [vmem:[%s1 + $0xd8] sm:$0xff]
    %v62 = vld [vmem:[%s1 + $0xe0] sm:$0xff]
    %v63 = vld [vmem:[%s1 + $0xe8] sm:$0xff]
    %v64 = vld [vmem:[%s1 + $0xf0] sm:$0xff]
    %v65 = vld [vmem:[%s1 + $0xf8] sm:$0xff]
    %v66 = vld [vmem:[%s1 + $0x100] sm:$0xff]
    %v67 = vld [vmem:[%s1 + $0x108] sm:$0xff]
    %v68 = vld [vmem:[%s1 + $0x110] sm:$0xff]
    %v69 = vld [vmem:[%s1 + $0x118] sm:$0xff]
    %v70 = vld [vmem:[%s1 + $0x120] sm:$0xff]
    %v71 = vld [vmem:[%s1 + $0x128] sm:$0xff]
    %v72 = vld [vmem:[%s1 + $0x130] sm:$0xff]
    %v73 = vld [vmem:[%s1 + $0x138] sm:$0xff]
    %v74 = vld [vmem:[%s1 + $0x140] sm:$0xff]
    %v75 = vld [vmem:[%s1 + $0x148] sm:$0xff]
    %v76 = vld [vmem:[%s1 + $0x150] sm:$0xff]
    %v77 = vld [vmem:[%s1 + $0x158] sm:$0xff]
    %v78 = vld [vmem:[%s1 + $0x160] sm:$0xff]
    %v79 = vld [vmem:[%s1 + $0x168] sm:$0xff]
    %v80 = vld [vmem:[%s1 + $0x170] sm:$0xff]
    %v81 = vld [vmem:[%s1 + $0x178] sm:$0xff]
    %v82 = vld [vmem:[%s1 + $0x180] sm:$0xff]
    %v83 = vld [vmem:[%s1 + $0x188] sm:$0xff]
    %v84 = vld [vmem:[%s1 + $0x190] sm:$0xff]
    %v85 = vld [vmem:[%s1 + $0x198] sm:$0xff]
    %v86 = vld [vmem:[%s1 + $0x1a0] sm:$0xff]
    %v87 = vld [vmem:[%s1 + $0x1a8] sm:$0xff]
    %v88 = vld [vmem:[%s1 + $0x1b0] sm:$0xff]
    %v89 = vld [vmem:[%s1 + $0x1b8] sm:$0xff]
    %v90 = vld [vmem:[%s1 + $0x1c0] sm:$0xff]
    %v91 = vld [vmem:[%s1 + $0x1c8] sm:$0xff]
    %v92 = vld [vmem:[%s1 + $0x1d0] sm:$0xff]
    %v93 = vld [vmem:[%s1 + $0x1d8] sm:$0xff]
    %v94 = vld [vmem:[%s1 + $0x1e0] sm:$0xff]
    %v95 = vld [vmem:[%s1 + $0x1e8] sm:$0xff]
    %v96 = vld [vmem:[%s1 + $0x1f0] sm:$0xff]
    %v97 = vld [vmem:[%s1 + $0x1f8] sm:$0xff]
    %v98 = vld [vmem:[%s1 + $0x200] sm:$0xff]
    %v99 = vld [vmem:[%s1 + $0x208] sm:$0xff]
    %v100 = vld [vmem:[%s1 + $0x210] sm:$0xff]
    %v101 = vld [vmem:[%s1 + $0x218] sm:$0xff]
    %v102 = vld [vmem:[%s1 + $0x220] sm:$0xff]
    %v103 = vld [vmem:[%s1 + $0x228] sm:$0xff]
    %v104 = vld [vmem:[%s1 + $0x230] sm:$0xff]
    %v105 = vld [vmem:[%s1 + $0x238] sm:$0xff]
    %v106 = vld [vmem:[%s1 + $0x240] sm:$0xff]
    %v107 = vld [vmem:[%s1 + $0x248] sm:$0xff]
    %v108 = vld [vmem:[%s1 + $0x250] sm:$0xff]
    %v109 = vld [vmem:[%s1 + $0x258] sm:$0xff]
    %v110 = vld [vmem:[%s1 + $0x260] sm:$0xff]
    %v111 = vld [vmem:[%s1 + $0x268] sm:$0xff]
    %v112 = vld [vmem:[%s1 + $0x270] sm:$0xff]
    %v113 = vld [vmem:[%s1 + $0x278] sm:$0xff]
    %v114 = vld [vmem:[%s1 + $0x280] sm:$0xff]
    %v115 = vld [vmem:[%s1 + $0x288] sm:$0xff]
    %v116 = vld [vmem:[%s1 + $0x290] sm:$0xff]
    %v117 = vld [vmem:[%s1 + $0x298] sm:$0xff]
    %v118 = vld [vmem:[%s1 + $0x2a0] sm:$0xff]
    %v119 = vld [vmem:[%s1 + $0x2a8] sm:$0xff]
    %v120 = vld [vmem:[%s1 + $0x2b0] sm:$0xff]
    %v121 = vld [vmem:[%s1 + $0x2b8] sm:$0xff]
    %v122 = vld [vmem:[%s1 + $0x2c0] sm:$0xff]
    %v123 = vld [vmem:[%s1 + $0x2c8] sm:$0xff]
    %v124 = vld [vmem:[%s1 + $0x2d0] sm:$0xff]
    %v125 = vld [vmem:[%s1 + $0x2d8] sm:$0xff]
    %v126 = vld [vmem:[%s1 + $0x2e0] sm:$0xff]
    %v127 = vld [vmem:[%s1 + $0x2e8] sm:$0xff]
    %v128 = vld [vmem:[%s1 + $0x2f0] sm:$0xff]
    %v129 = vld [vmem:[%s1 + $0x2f8] sm:$0xff]
    %v130 = vld [vmem:[%s1 + $0x300] sm:$0xff]
    %v131 = vld [vmem:[%s1 + $0x308] sm:$0xff]
    %v132 = vld [vmem:[%s1 + $0x310] sm:$0xff]
    %v133 = vld [vmem:[%s1 + $0x318] sm:$0xff]
    %v134 = vld [vmem:[%s1 + $0x320] sm:$0xff]
    %v135 = vld [vmem:[%s1 + $0x328] sm:$0xff]
    %v136 = vld [vmem:[%s1 + $0x330] sm:$0xff]
    %v137 = vld [vmem:[%s1 + $0x338] sm:$0xff]
    %v138 = vld [vmem:[%s1 + $0x340] sm:$0xff]
    %v139 = vld [vmem:[%s1 + $0x348] sm:$0xff]
    %v140 = vld [vmem:[%s1 + $0x350] sm:$0xff]
    %v141 = vld [vmem:[%s1 + $0x358] sm:$0xff]
    %v142 = vld [vmem:[%s1 + $0x360] sm:$0xff]
    %v143 = vld [vmem:[%s1 + $0x368] sm:$0xff]
    %v144 = vld [vmem:[%s1 + $0x370] sm:$0xff]
    %v145 = vld [vmem:[%s1 + $0x378] sm:$0xff]
    %v146 = vld [vmem:[%s2] sm:$0x1]
    %v148 = vlaneseq
    %v149 = vshrl.u32 %v148, 7
    %v150 = vsub.s32 0, %v149
    %v151 = vrot.slane %v146, %v150
    %153 = vmatprep.subr.mxu0 0.0
    %154 = vmatpush1.msra.mxu0 %v49
    %155 = vmatprep.subr.mxu0 0.0
    %156 = vmatpush1.msra.mxu0 %v48
    %157 = vmatprep.subr.mxu0 0.0
    %158 = vmatpush1.msra.mxu0 %v47
    %159 = vmatprep.subr.mxu0 0.0
    %160 = vmatpush1.msra.mxu0 %v46
    %161 = vmatprep.subr.mxu0 0.0
    %162 = vmatpush1.msra.mxu0 %v45
    %163 = vmatprep.subr.mxu0 0.0
    %164 = vmatpush1.msra.mxu0 %v44
    %165 = vmatprep.subr.mxu0 0.0
    %166 = vmatpush1.msra.mxu0 %v43
    %167 = vmatprep.subr.mxu0 0.0
    %168 = vmatpush1.msra.mxu0 %v42
    %169 = vmatprep.subr.mxu0 0.0
    %170 = vmatpush1.msra.mxu0 %v41
    %171 = vmatprep.subr.mxu0 0.0
    %172 = vmatpush1.msra.mxu0 %v40
    %173 = vmatprep.subr.mxu0 0.0
    %174 = vmatpush1.msra.mxu0 %v39
    %175 = vmatprep.subr.mxu0 0.0
    %176 = vmatpush1.msra.mxu0 %v38
    %177 = vmatprep.subr.mxu0 0.0
    %178 = vmatpush1.msra.mxu0 %v37
    %179 = vmatprep.subr.mxu0 0.0
    %180 = vmatpush1.msra.mxu0 %v36
    %181 = vmatprep.subr.mxu0 0.0
    %182 = vmatpush1.msra.mxu0 %v35
    %183 = vmatprep.subr.mxu0 0.0
    %184 = vmatpush1.msra.mxu0 %v34
    %185 = vmatprep.subr.mxu0 0.0
    %186 = vmatpush2.msra.mxu0 %v65
    %187 = vmatprep.subr.mxu0 0.0
    %188 = vmatpush2.msra.mxu0 %v64
    %189 = vmatprep.subr.mxu0 0.0
    %190 = vmatpush2.msra.mxu0 %v63
    %191 = vmatprep.subr.mxu0 0.0
    %192 = vmatpush2.msra.mxu0 %v62
    %193 = vmatprep.subr.mxu0 0.0
    %194 = vmatpush2.msra.mxu0 %v61
    %195 = vmatprep.subr.mxu0 0.0
    %196 = vmatpush2.msra.mxu0 %v60
    %197 = vmatprep.subr.mxu0 0.0
    %198 = vmatpush2.msra.mxu0 %v59
    %199 = vmatprep.subr.mxu0 0.0
    %200 = vmatpush2.msra.mxu0 %v58
    %201 = vmatprep.subr.mxu0 0.0
    %202 = vmatpush2.msra.mxu0 %v57
    %203 = vmatprep.subr.mxu0 0.0
    %204 = vmatpush2.msra.mxu0 %v56
    %205 = vmatprep.subr.mxu0 0.0
    %206 = vmatpush2.msra.mxu0 %v55
    %207 = vmatprep.subr.mxu0 0.0
    %208 = vmatpush2.msra.mxu0 %v54
    %209 = vmatprep.subr.mxu0 0.0
    %210 = vmatpush2.msra.mxu0 %v53
    %211 = vmatprep.subr.mxu0 0.0
    %212 = vmatpush2.msra.mxu0 %v52
    %213 = vmatprep.subr.mxu0 0.0
    %214 = vmatpush2.msra.mxu0 %v51
    %215 = vmatprep.subr.mxu0 0.0
    %216 = vmatpush2.msra.mxu0 %v50
    %217 = vmatprep.mubr.f32.mxu0 %v28
    %218 = vmatmul.mubr.f32.gmra.mxu0 %v27
    %v219 = vpop.f32.mrf.mxu0
    %v220 = vadd.f32 %v151, %v219
    %v221 = vpop.f32.mrf.mxu0
    %222 = vdwg.mxu0
    %223 = vmatprep.subr.mxu0 0.0
    %224 = vmatpush1.msra.mxu0 %v81
    %225 = vmatprep.subr.mxu0 0.0
    %226 = vmatpush1.msra.mxu0 %v80
    %227 = vmatprep.subr.mxu0 0.0
    %228 = vmatpush1.msra.mxu0 %v79
    %229 = vmatprep.subr.mxu0 0.0
    %230 = vmatpush1.msra.mxu0 %v78
    %231 = vmatprep.subr.mxu0 0.0
    %232 = vmatpush1.msra.mxu0 %v77
    %233 = vmatprep.subr.mxu0 0.0
    %234 = vmatpush1.msra.mxu0 %v76
    %235 = vmatprep.subr.mxu0 0.0
    %236 = vmatpush1.msra.mxu0 %v75
    %237 = vmatprep.subr.mxu0 0.0
    %238 = vmatpush1.msra.mxu0 %v74
    %239 = vmatprep.subr.mxu0 0.0
    %240 = vmatpush1.msra.mxu0 %v73
    %241 = vmatprep.subr.mxu0 0.0
    %242 = vmatpush1.msra.mxu0 %v72
    %243 = vmatprep.subr.mxu0 0.0
    %244 = vmatpush1.msra.mxu0 %v71
    %245 = vmatprep.subr.mxu0 0.0
    %246 = vmatpush1.msra.mxu0 %v70
    %247 = vmatprep.subr.mxu0 0.0
    %248 = vmatpush1.msra.mxu0 %v69
    %249 = vmatprep.subr.mxu0 0.0
    %250 = vmatpush1.msra.mxu0 %v68
    %251 = vmatprep.subr.mxu0 0.0
    %252 = vmatpush1.msra.mxu0 %v67
    %253 = vmatprep.subr.mxu0 0.0
    %254 = vmatpush1.msra.mxu0 %v66
    %255 = vmatprep.subr.mxu0 0.0
    %256 = vmatpush2.msra.mxu0 %v97
    %257 = vmatprep.subr.mxu0 0.0
    %258 = vmatpush2.msra.mxu0 %v96
    %259 = vmatprep.subr.mxu0 0.0
    %260 = vmatpush2.msra.mxu0 %v95
    %261 = vmatprep.subr.mxu0 0.0
    %262 = vmatpush2.msra.mxu0 %v94
    %263 = vmatprep.subr.mxu0 0.0
    %264 = vmatpush2.msra.mxu0 %v93
    %265 = vmatprep.subr.mxu0 0.0
    %266 = vmatpush2.msra.mxu0 %v92
    %267 = vmatprep.subr.mxu0 0.0
    %268 = vmatpush2.msra.mxu0 %v91
    %269 = vmatprep.subr.mxu0 0.0
    %270 = vmatpush2.msra.mxu0 %v90
    %271 = vmatprep.subr.mxu0 0.0
    %272 = vmatpush2.msra.mxu0 %v89
    %273 = vmatprep.subr.mxu0 0.0
    %274 = vmatpush2.msra.mxu0 %v88
    %275 = vmatprep.subr.mxu0 0.0
    %276 = vmatpush2.msra.mxu0 %v87
    %277 = vmatprep.subr.mxu0 0.0
    %278 = vmatpush2.msra.mxu0 %v86
    %279 = vmatprep.subr.mxu0 0.0
    %280 = vmatpush2.msra.mxu0 %v85
    %281 = vmatprep.subr.mxu0 0.0
    %282 = vmatpush2.msra.mxu0 %v84
    %283 = vmatprep.subr.mxu0 0.0
    %284 = vmatpush2.msra.mxu0 %v83
    %285 = vmatprep.subr.mxu0 0.0
    %286 = vmatpush2.msra.mxu0 %v82
    %287 = vmatprep.mubr.f32.mxu0 %v30
    %288 = vmatmul.mubr.f32.gmra.mxu0 %v29
    %v289 = vpop.f32.mrf.mxu0
    %v290 = vadd.f32 %v220, %v289
    %v291 = vpop.f32.mrf.mxu0
    %292 = vdwg.mxu0
    %293 = vmatprep.subr.mxu0 0.0
    %294 = vmatpush1.msra.mxu0 %v113
    %295 = vmatprep.subr.mxu0 0.0
    %296 = vmatpush1.msra.mxu0 %v112
    %297 = vmatprep.subr.mxu0 0.0
    %298 = vmatpush1.msra.mxu0 %v111
    %299 = vmatprep.subr.mxu0 0.0
    %300 = vmatpush1.msra.mxu0 %v110
    %301 = vmatprep.subr.mxu0 0.0
    %302 = vmatpush1.msra.mxu0 %v109
    %303 = vmatprep.subr.mxu0 0.0
    %304 = vmatpush1.msra.mxu0 %v108
    %305 = vmatprep.subr.mxu0 0.0
    %306 = vmatpush1.msra.mxu0 %v107
    %307 = vmatprep.subr.mxu0 0.0
    %308 = vmatpush1.msra.mxu0 %v106
    %309 = vmatprep.subr.mxu0 0.0
    %310 = vmatpush1.msra.mxu0 %v105
    %311 = vmatprep.subr.mxu0 0.0
    %312 = vmatpush1.msra.mxu0 %v104
    %313 = vmatprep.subr.mxu0 0.0
    %314 = vmatpush1.msra.mxu0 %v103
    %315 = vmatprep.subr.mxu0 0.0
    %316 = vmatpush1.msra.mxu0 %v102
    %317 = vmatprep.subr.mxu0 0.0
    %318 = vmatpush1.msra.mxu0 %v101
    %319 = vmatprep.subr.mxu0 0.0
    %320 = vmatpush1.msra.mxu0 %v100
    %321 = vmatprep.subr.mxu0 0.0
    %322 = vmatpush1.msra.mxu0 %v99
    %323 = vmatprep.subr.mxu0 0.0
    %324 = vmatpush1.msra.mxu0 %v98
    %325 = vmatprep.subr.mxu0 0.0
    %326 = vmatpush2.msra.mxu0 %v129
    %327 = vmatprep.subr.mxu0 0.0
    %328 = vmatpush2.msra.mxu0 %v128
    %329 = vmatprep.subr.mxu0 0.0
    %330 = vmatpush2.msra.mxu0 %v127
    %331 = vmatprep.subr.mxu0 0.0
    %332 = vmatpush2.msra.mxu0 %v126
    %333 = vmatprep.subr.mxu0 0.0
    %334 = vmatpush2.msra.mxu0 %v125
    %335 = vmatprep.subr.mxu0 0.0
    %336 = vmatpush2.msra.mxu0 %v124
    %337 = vmatprep.subr.mxu0 0.0
    %338 = vmatpush2.msra.mxu0 %v123
    %339 = vmatprep.subr.mxu0 0.0
    %340 = vmatpush2.msra.mxu0 %v122
    %341 = vmatprep.subr.mxu0 0.0
    %342 = vmatpush2.msra.mxu0 %v121
    %343 = vmatprep.subr.mxu0 0.0
    %344 = vmatpush2.msra.mxu0 %v120
    %345 = vmatprep.subr.mxu0 0.0
    %346 = vmatpush2.msra.mxu0 %v119
    %347 = vmatprep.subr.mxu0 0.0
    %348 = vmatpush2.msra.mxu0 %v118
    %349 = vmatprep.subr.mxu0 0.0
    %350 = vmatpush2.msra.mxu0 %v117
    %351 = vmatprep.subr.mxu0 0.0
    %352 = vmatpush2.msra.mxu0 %v116
    %353 = vmatprep.subr.mxu0 0.0
    %354 = vmatpush2.msra.mxu0 %v115
    %355 = vmatprep.subr.mxu0 0.0
    %356 = vmatpush2.msra.mxu0 %v114
    %357 = vmatprep.mubr.f32.mxu0 %v32
    %358 = vmatmul.mubr.f32.gmra.mxu0 %v31
    %v359 = vpop.f32.mrf.mxu0
    %v360 = vadd.f32 %v290, %v359
    %v361 = vpop.f32.mrf.mxu0
    %362 = vdwg.mxu0
    %363 = vmatprep.subr.mxu0 0.0
    %364 = vmatpush1.msra.mxu0 %v145
    %365 = vmatprep.subr.mxu0 0.0
    %366 = vmatpush1.msra.mxu0 %v144
    %367 = vmatprep.subr.mxu0 0.0
    %368 = vmatpush1.msra.mxu0 %v143
    %369 = vmatprep.subr.mxu0 0.0
    %370 = vmatpush1.msra.mxu0 %v142
    %371 = vmatprep.subr.mxu0 0.0
    %372 = vmatpush1.msra.mxu0 %v141
    %373 = vmatprep.subr.mxu0 0.0
    %374 = vmatpush1.msra.mxu0 %v140
    %375 = vmatprep.subr.mxu0 0.0
    %376 = vmatpush1.msra.mxu0 %v139
    %377 = vmatprep.subr.mxu0 0.0
    %378 = vmatpush1.msra.mxu0 %v138
    %379 = vmatprep.subr.mxu0 0.0
    %380 = vmatpush1.msra.mxu0 %v137
    %381 = vmatprep.subr.mxu0 0.0
    %382 = vmatpush1.msra.mxu0 %v136
    %383 = vmatprep.subr.mxu0 0.0
    %384 = vmatpush1.msra.mxu0 %v135
    %385 = vmatprep.subr.mxu0 0.0
    %386 = vmatpush1.msra.mxu0 %v134
    %387 = vmatprep.subr.mxu0 0.0
    %388 = vmatpush1.msra.mxu0 %v133
    %389 = vmatprep.subr.mxu0 0.0
    %390 = vmatpush1.msra.mxu0 %v132
    %391 = vmatprep.subr.mxu0 0.0
    %392 = vmatpush1.msra.mxu0 %v131
    %393 = vmatprep.subr.mxu0 0.0
    %394 = vmatpush1.msra.mxu0 %v130
    %395 = vmatprep.subr.mxu0 0.0
    %396 = vmatpush2.msra.mxu0 0.0
    %397 = vmatprep.subr.mxu0 0.0
    %398 = vmatpush2.msra.mxu0 0.0
    %399 = vmatprep.subr.mxu0 0.0
    %400 = vmatpush2.msra.mxu0 0.0
    %401 = vmatprep.subr.mxu0 0.0
    %402 = vmatpush2.msra.mxu0 0.0
    %403 = vmatprep.subr.mxu0 0.0
    %404 = vmatpush2.msra.mxu0 0.0
    %405 = vmatprep.subr.mxu0 0.0
    %406 = vmatpush2.msra.mxu0 0.0
    %407 = vmatprep.subr.mxu0 0.0
    %408 = vmatpush2.msra.mxu0 0.0
    %409 = vmatprep.subr.mxu0 0.0
    %410 = vmatpush2.msra.mxu0 0.0
    %411 = vmatprep.subr.mxu0 0.0
    %412 = vmatpush2.msra.mxu0 0.0
    %413 = vmatprep.subr.mxu0 0.0
    %414 = vmatpush2.msra.mxu0 0.0
    %415 = vmatprep.subr.mxu0 0.0
    %416 = vmatpush2.msra.mxu0 0.0
    %417 = vmatprep.subr.mxu0 0.0
    %418 = vmatpush2.msra.mxu0 0.0
    %419 = vmatprep.subr.mxu0 0.0
    %420 = vmatpush2.msra.mxu0 0.0
    %421 = vmatprep.subr.mxu0 0.0
    %422 = vmatpush2.msra.mxu0 0.0
    %423 = vmatprep.subr.mxu0 0.0
    %424 = vmatpush2.msra.mxu0 0.0
    %425 = vmatprep.subr.mxu0 0.0
    %426 = vmatpush2.msra.mxu0 0.0
    %427 = vmatprep.mubr.f32.mxu0 0.0
    %428 = vmatmul.mubr.f32.gmra.mxu0 %v33
    %v429 = vpop.f32.mrf.mxu0
    %v430 = vadd.f32 %v360, %v429
    %v431 = vpop.f32.mrf.mxu0
    %432 = vdwg.mxu0
    %v433 = vxor.u32 %v430, 2147483648
    %v434 = vmul.f32 %v433, 1.442695
    %v435 = vpow.pop %v434
    %v436 = vadd.f32 %v435, 1.0
    %v437 = vrcp.pop %v436
    %v438 = vmul.f32 1.0, %v437
    %v439 = vld [vmem:[%s3] sm:$0xff]
    %v440 = vld [vmem:[%s3 + $0x8] sm:$0xff]
    %v441 = vld [vmem:[%s3 + $0x10] sm:$0xff]
    %v442 = vld [vmem:[%s3 + $0x18] sm:$0xff]
    %v443 = vld [vmem:[%s4] sm:$0x1]
    %v445 = vlaneseq
    %v446 = vshrl.u32 %v445, 7
    %v447 = vsub.s32 0, %v446
    %v448 = vrot.slane %v443, %v447
    %vm450 = vcmask 261120
    %v452 = vsel %vm450, %v438, 0
    %454 = vmatprep.subr.mxu0 0.0
    %455 = vmatpush1.msra.mxu0 0.0
    %456 = vmatprep.subr.mxu0 0.0
    %457 = vmatpush1.msra.mxu0 0.0
    %458 = vmatprep.subr.mxu0 0.0
    %459 = vmatpush1.msra.mxu0 0.0
    %460 = vmatprep.subr.mxu0 0.0
    %461 = vmatpush1.msra.mxu0 0.0
    %462 = vmatprep.subr.mxu0 0.0
    %463 = vmatpush1.msra.mxu0 0.0
    %464 = vmatprep.subr.mxu0 0.0
    %465 = vmatpush1.msra.mxu0 0.0
    %466 = vmatprep.subr.mxu0 0.0
    %467 = vmatpush1.msra.mxu0 0.0
    %468 = vmatprep.subr.mxu0 0.0
    %469 = vmatpush1.msra.mxu0 0.0
    %470 = vmatprep.subr.mxu0 0.0
    %471 = vmatpush1.msra.mxu0 0.0
    %472 = vmatprep.subr.mxu0 0.0
    %473 = vmatpush1.msra.mxu0 0.0
    %474 = vmatprep.subr.mxu0 0.0
    %475 = vmatpush1.msra.mxu0 0.0
    %476 = vmatprep.subr.mxu0 0.0
    %477 = vmatpush1.msra.mxu0 0.0
    %478 = vmatprep.subr.mxu0 0.0
    %479 = vmatpush1.msra.mxu0 %v442
    %480 = vmatprep.subr.mxu0 0.0
    %481 = vmatpush1.msra.mxu0 %v441
    %482 = vmatprep.subr.mxu0 0.0
    %483 = vmatpush1.msra.mxu0 %v440
    %484 = vmatprep.subr.mxu0 0.0
    %485 = vmatpush1.msra.mxu0 %v439
    %486 = vmatprep.subr.mxu0 0.0
    %487 = vmatpush2.msra.mxu0 0.0
    %488 = vmatprep.subr.mxu0 0.0
    %489 = vmatpush2.msra.mxu0 0.0
    %490 = vmatprep.subr.mxu0 0.0
    %491 = vmatpush2.msra.mxu0 0.0
    %492 = vmatprep.subr.mxu0 0.0
    %493 = vmatpush2.msra.mxu0 0.0
    %494 = vmatprep.subr.mxu0 0.0
    %495 = vmatpush2.msra.mxu0 0.0
    %496 = vmatprep.subr.mxu0 0.0
    %497 = vmatpush2.msra.mxu0 0.0
    %498 = vmatprep.subr.mxu0 0.0
    %499 = vmatpush2.msra.mxu0 0.0
    %500 = vmatprep.subr.mxu0 0.0
    %501 = vmatpush2.msra.mxu0 0.0
    %502 = vmatprep.subr.mxu0 0.0
    %503 = vmatpush2.msra.mxu0 0.0
    %504 = vmatprep.subr.mxu0 0.0
    %505 = vmatpush2.msra.mxu0 0.0
    %506 = vmatprep.subr.mxu0 0.0
    %507 = vmatpush2.msra.mxu0 0.0
    %508 = vmatprep.subr.mxu0 0.0
    %509 = vmatpush2.msra.mxu0 0.0
    %510 = vmatprep.subr.mxu0 0.0
    %511 = vmatpush2.msra.mxu0 0.0
    %512 = vmatprep.subr.mxu0 0.0
    %513 = vmatpush2.msra.mxu0 0.0
    %514 = vmatprep.subr.mxu0 0.0
    %515 = vmatpush2.msra.mxu0 0.0
    %516 = vmatprep.subr.mxu0 0.0
    %517 = vmatpush2.msra.mxu0 0.0
    %518 = vmatprep.mubr.f32.mxu0 0.0
    %519 = vmatmul.mubr.f32.gmra.mxu0 %v452
    %v520 = vpop.f32.mrf.mxu0
    %v521 = vadd.f32 %v448, %v520
    %v522 = vpop.f32.mrf.mxu0
    %523 = vdwg.mxu0
    %v524 = vxor.u32 %v521, 2147483648
    %v525 = vmul.f32 %v524, 1.442695
    %v526 = vpow.pop %v525
    %v527 = vadd.f32 %v526, 1.0
    %v528 = vrcp.pop %v527
    %v529 = vmul.f32 1.0, %v528
    %v530 = vld [vmem:[%s5] sm:$0xff]
    %v531 = vld [vmem:[%s5 + $0x8] sm:$0xff]
    %v532 = vld [vmem:[%s5 + $0x10] sm:$0xff]
    %v533 = vld [vmem:[%s5 + $0x18] sm:$0xff]
    %v534 = vld [vmem:[%s6] sm:$0x1]
    %v536 = vlaneseq
    %v537 = vshrl.u32 %v536, 7
    %v538 = vsub.s32 0, %v537
    %v539 = vrot.slane %v534, %v538
    %v542 = vsel %vm450, %v529, 0
    %544 = vmatprep.subr.mxu0 0.0
    %545 = vmatpush1.msra.mxu0 0.0
    %546 = vmatprep.subr.mxu0 0.0
    %547 = vmatpush1.msra.mxu0 0.0
    %548 = vmatprep.subr.mxu0 0.0
    %549 = vmatpush1.msra.mxu0 0.0
    %550 = vmatprep.subr.mxu0 0.0
    %551 = vmatpush1.msra.mxu0 0.0
    %552 = vmatprep.subr.mxu0 0.0
    %553 = vmatpush1.msra.mxu0 0.0
    %554 = vmatprep.subr.mxu0 0.0
    %555 = vmatpush1.msra.mxu0 0.0
    %556 = vmatprep.subr.mxu0 0.0
    %557 = vmatpush1.msra.mxu0 0.0
    %558 = vmatprep.subr.mxu0 0.0
    %559 = vmatpush1.msra.mxu0 0.0
    %560 = vmatprep.subr.mxu0 0.0
    %561 = vmatpush1.msra.mxu0 0.0
    %562 = vmatprep.subr.mxu0 0.0
    %563 = vmatpush1.msra.mxu0 0.0
    %564 = vmatprep.subr.mxu0 0.0
    %565 = vmatpush1.msra.mxu0 0.0
    %566 = vmatprep.subr.mxu0 0.0
    %567 = vmatpush1.msra.mxu0 0.0
    %568 = vmatprep.subr.mxu0 0.0
    %569 = vmatpush1.msra.mxu0 %v533
    %570 = vmatprep.subr.mxu0 0.0
    %571 = vmatpush1.msra.mxu0 %v532
    %572 = vmatprep.subr.mxu0 0.0
    %573 = vmatpush1.msra.mxu0 %v531
    %574 = vmatprep.subr.mxu0 0.0
    %575 = vmatpush1.msra.mxu0 %v530
    %576 = vmatprep.subr.mxu0 0.0
    %577 = vmatpush2.msra.mxu0 0.0
    %578 = vmatprep.subr.mxu0 0.0
    %579 = vmatpush2.msra.mxu0 0.0
    %580 = vmatprep.subr.mxu0 0.0
    %581 = vmatpush2.msra.mxu0 0.0
    %582 = vmatprep.subr.mxu0 0.0
    %583 = vmatpush2.msra.mxu0 0.0
    %584 = vmatprep.subr.mxu0 0.0
    %585 = vmatpush2.msra.mxu0 0.0
    %586 = vmatprep.subr.mxu0 0.0
    %587 = vmatpush2.msra.mxu0 0.0
    %588 = vmatprep.subr.mxu0 0.0
    %589 = vmatpush2.msra.mxu0 0.0
    %590 = vmatprep.subr.mxu0 0.0
    %591 = vmatpush2.msra.mxu0 0.0
    %592 = vmatprep.subr.mxu0 0.0
    %593 = vmatpush2.msra.mxu0 0.0
    %594 = vmatprep.subr.mxu0 0.0
    %595 = vmatpush2.msra.mxu0 0.0
    %596 = vmatprep.subr.mxu0 0.0
    %597 = vmatpush2.msra.mxu0 0.0
    %598 = vmatprep.subr.mxu0 0.0
    %599 = vmatpush2.msra.mxu0 0.0
    %600 = vmatprep.subr.mxu0 0.0
    %601 = vmatpush2.msra.mxu0 0.0
    %602 = vmatprep.subr.mxu0 0.0
    %603 = vmatpush2.msra.mxu0 0.0
    %604 = vmatprep.subr.mxu0 0.0
    %605 = vmatpush2.msra.mxu0 0.0
    %606 = vmatprep.subr.mxu0 0.0
    %607 = vmatpush2.msra.mxu0 0.0
    %608 = vmatprep.mubr.f32.mxu0 0.0
    %609 = vmatmul.mubr.f32.gmra.mxu0 %v542
    %v610 = vpop.f32.mrf.mxu0
    %v611 = vadd.f32 %v539, %v610
    %v612 = vpop.f32.mrf.mxu0
    %613 = vdwg.mxu0
    %v614 = vlaneseq
    %v615 = vand.u32 %v614, 127
    %vm616 = vcmp.lt.s32.totalorder %v615, 10
    %v617 = vsel %vm616, %v611, -inf
    %618 = vmax.xlane.f32.xlu0 %v617
    %v619 = vpop.xlane.xlu0 %618
    %v620 = vsub.f32 %v617, %v619
    %v621 = vmul.f32 %v620, 1.442695
    %v622 = vpow.pop %v621
    %623 = vadd.xlane.f32.xlu0 %v622
    %v624 = vpop.xlane.xlu0 %623
    %v625 = vlog2.pop %v624
    %v626 = vmul.f32 %v625, 0.6931472
    %v627 = vsub.f32 %v620, %v626
    %628 = vst [vmem:[#allocation2] sm:$0xff] %v627
    // Predicated region
    $region30: #{tpu_custom_call.1} parent=1 // pred_check
      _
    $region31: #{tpu_custom_call.1} parent=1 // pred_check_branch
      %630 = sbr.rel (0) target = $region33
    $region32: #{tpu_custom_call.1} parent=1 // pred_region
      %s632 = ssub.s32 128, 128
      %633 = vsyncadd [#allocation3], %s632
      %s635 = sshll.u32 [#allocation2], 4
      %s636 = int_to_ptr.vmem [resolvable:$true] %s635
      %638 = dma.vmem_to_hbm [thread:$0]  %s636, 128, %s7, [#allocation3]
    $region33: #{tpu_custom_call.1} parent=1 // pred_fallthru
      _
    // Predicated region
    $region34: #{tpu_custom_call.1} parent=1 // pred_check
      _
    $region35: #{tpu_custom_call.1} parent=1 // pred_check_branch
      %640 = sbr.rel (0) target = $region37
    $region36: #{tpu_custom_call.1} parent=1 // pred_region
      %641 = dma.done [#allocation3], 128
    $region37: #{tpu_custom_call.1} parent=1 // pred_fallthru
      _
    %642 = vsyncpa [#allocation3], 1

// kernel: tpu_custom_call.1
$region0: #{tpu_custom_call.1}
  #allocation0 [shape = 'u32[]', space=smem, size = 0x4, offset = 0x4, fixed_abs, tag = 'smem constant byte address 0x4 - core index']
  #allocation1 [shape = 'u32[144,128]{1,0:T(1,128)}', space=vmem, size = 0x12000, scoped, tag = 'internal scratch']
  %s0 = inlined_call_operand.vmem [shape: f32[8,896], index: 0, kind: input, shape index: {}]
  %s1 = inlined_call_operand.vmem [shape: f32[896,32], index: 1, kind: input, shape index: {}]
  %s2 = inlined_call_operand.vmem [shape: f32[1,32], index: 2, kind: input, shape index: {}]
  %s3 = inlined_call_operand.vmem [shape: f32[32,32], index: 3, kind: input, shape index: {}]
  %s4 = inlined_call_operand.vmem [shape: f32[1,32], index: 4, kind: input, shape index: {}]
  %s5 = inlined_call_operand.vmem [shape: f32[32,128], index: 5, kind: input, shape index: {}]
  %s6 = inlined_call_operand.vmem [shape: f32[1,128], index: 6, kind: input, shape index: {}]
  %s7 = inlined_call_operand.hbm [shape: f32[8,128], index: 7, kind: output, shape index: {}]
  %s8 = sld [smem:[#allocation0]]
  $region38: #{tpu_custom_call.1} parent=0
    _
  %s10 = ssub.s32 1, %s8
  %s11 = scalar_select 0, %s10, %s8
  $region1: #{tpu_custom_call.1} parent=0
    #allocation2 [shape = 'u8[4096]{0}', space=vmem, size = 0x1000, scoped, tag = 'output window, operand 0, single buffered']
    #allocation3 [shape = 's32[1]{0}', space=sflag, size = 0x4, scoped, tag = 'scoped memory for tpu_custom_call.1']
    %12 = vsyncpa [#allocation3], 0
    // Predicated region
    $region2: #{tpu_custom_call.1} parent=1 // pred_check
      _
    $region3: #{tpu_custom_call.1} parent=1 // pred_check_branch
      %14 = sbr.rel (0) target = $region5
    $region4: #{tpu_custom_call.1} parent=1 // pred_region
      _
    $region5: #{tpu_custom_call.1} parent=1 // pred_fallthru
      _
    // Predicated region
    $region6: #{tpu_custom_call.1} parent=1 // pred_check
      _
    $region7: #{tpu_custom_call.1} parent=1 // pred_check_branch
      %16 = sbr.rel (0) target = $region9
    $region8: #{tpu_custom_call.1} parent=1 // pred_region
      _
    $region9: #{tpu_custom_call.1} parent=1 // pred_fallthru
      _
    // Predicated region
    $region10: #{tpu_custom_call.1} parent=1 // pred_check
      _
    $region11: #{tpu_custom_call.1} parent=1 // pred_check_branch
      %18 = sbr.rel (0) target = $region13
    $region12: #{tpu_custom_call.1} parent=1 // pred_region
      _
    $region13: #{tpu_custom_call.1} parent=1 // pred_fallthru
      _
    // Predicated region
    $region14: #{tpu_custom_call.1} parent=1 // pred_check
      _
    $region15: #{tpu_custom_call.1} parent=1 // pred_check_branch
      %20 = sbr.rel (0) target = $region17
    $region16: #{tpu_custom_call.1} parent=1 // pred_region
      _
    $region17: #{tpu_custom_call.1} parent=1 // pred_fallthru
      _
    // Predicated region
    $region18: #{tpu_custom_call.1} parent=1 // pred_check
      _
    $region19: #{tpu_custom_call.1} parent=1 // pred_check_branch
      %22 = sbr.rel (0) target = $region21
    $region20: #{tpu_custom_call.1} parent=1 // pred_region
      _
    $region21: #{tpu_custom_call.1} parent=1 // pred_fallthru
      _
    // Predicated region
    $region22: #{tpu_custom_call.1} parent=1 // pred_check
      _
    $region23: #{tpu_custom_call.1} parent=1 // pred_check_branch
      %24 = sbr.rel (0) target = $region25
    $region24: #{tpu_custom_call.1} parent=1 // pred_region
      _
    $region25: #{tpu_custom_call.1} parent=1 // pred_fallthru
      _
    // Predicated region
    $region26: #{tpu_custom_call.1} parent=1 // pred_check
      _
    $region27: #{tpu_custom_call.1} parent=1 // pred_check_branch
      %26 = sbr.rel (0) target = $region29
    $region28: #{tpu_custom_call.1} parent=1 // pred_region
      _
    $region29: #{tpu_custom_call.1} parent=1 // pred_fallthru
      _
    %v27 = vld [vmem:[%s0] sm:$0xff]
    %v28 = vld [vmem:[%s0 + $0x8] sm:$0xff]
    %v29 = vld [vmem:[%s0 + $0x10] sm:$0xff]
    %v30 = vld [vmem:[%s0 + $0x18] sm:$0xff]
    %v31 = vld [vmem:[%s0 + $0x20] sm:$0xff]
    %v32 = vld [vmem:[%s0 + $0x28] sm:$0xff]
    %v33 = vld [vmem:[%s0 + $0x30] sm:$0xff]
    %v34 = vld [vmem:[%s1] sm:$0xff]
    %v35 = vld [vmem:[%s1 + $0x8] sm:$0xff]
    %v36 = vld [vmem:[%s1 + $0x10] sm:$0xff]
    %v37 = vld [vmem:[%s1 + $0x18] sm:$0xff]
    %v38 = vld [vmem:[%s1 + $0x20] sm:$0xff]
    %v39 = vld [vmem:[%s1 + $0x28] sm:$0xff]
    %v40 = vld [vmem:[%s1 + $0x30] sm:$0xff]
    %v41 = vld [vmem:[%s1 + $0x38] sm:$0xff]
    %v42 = vld [vmem:[%s1 + $0x40] sm:$0xff]
    %v43 = vld [vmem:[%s1 + $0x48] sm:$0xff]
    %v44 = vld [vmem:[%s1 + $0x50] sm:$0xff]
    %v45 = vld [vmem:[%s1 + $0x58] sm:$0xff]
    %v46 = vld [vmem:[%s1 + $0x60] sm:$0xff]
    %v47 = vld [vmem:[%s1 + $0x68] sm:$0xff]
    %v48 = vld [vmem:[%s1 + $0x70] sm:$0xff]
    %v49 = vld [vmem:[%s1 + $0x78] sm:$0xff]
    %v50 = vld [vmem:[%s1 + $0x80] sm:$0xff]
    %v51 = vld [vmem:[%s1 + $0x88] sm:$0xff]
    %v52 = vld [vmem:[%s1 + $0x90] sm:$0xff]
    %v53 = vld [vmem:[%s1 + $0x98] sm:$0xff]
    %v54 = vld [vmem:[%s1 + $0xa0] sm:$0xff]
    %v55 = vld [vmem:[%s1 + $0xa8] sm:$0xff]
    %v56 = vld [vmem:[%s1 + $0xb0] sm:$0xff]
    %v57 = vld [vmem:[%s1 + $0xb8] sm:$0xff]
    %v58 = vld [vmem:[%s1 + $0xc0] sm:$0xff]
    %v59 = vld [vmem:[%s1 + $0xc8] sm:$0xff]
    %v60 = vld [vmem:[%s1 + $0xd0] sm:$0xff]
    %v61 = vld [vmem:[%s1 + $0xd8] sm:$0xff]
    %v62 = vld [vmem:[%s1 + $0xe0] sm:$0xff]
    %v63 = vld [vmem:[%s1 + $0xe8] sm:$0xff]
    %v64 = vld [vmem:[%s1 + $0xf0] sm:$0xff]
    %v65 = vld [vmem:[%s1 + $0xf8] sm:$0xff]
    %v66 = vld [vmem:[%s1 + $0x100] sm:$0xff]
    %v67 = vld [vmem:[%s1 + $0x108] sm:$0xff]
    %v68 = vld [vmem:[%s1 + $0x110] sm:$0xff]
    %v69 = vld [vmem:[%s1 + $0x118] sm:$0xff]
    %v70 = vld [vmem:[%s1 + $0x120] sm:$0xff]
    %v71 = vld [vmem:[%s1 + $0x128] sm:$0xff]
    %v72 = vld [vmem:[%s1 + $0x130] sm:$0xff]
    %v73 = vld [vmem:[%s1 + $0x138] sm:$0xff]
    %v74 = vld [vmem:[%s1 + $0x140] sm:$0xff]
    %v75 = vld [vmem:[%s1 + $0x148] sm:$0xff]
    %v76 = vld [vmem:[%s1 + $0x150] sm:$0xff]
    %v77 = vld [vmem:[%s1 + $0x158] sm:$0xff]
    %v78 = vld [vmem:[%s1 + $0x160] sm:$0xff]
    %v79 = vld [vmem:[%s1 + $0x168] sm:$0xff]
    %v80 = vld [vmem:[%s1 + $0x170] sm:$0xff]
    %v81 = vld [vmem:[%s1 + $0x178] sm:$0xff]
    %v82 = vld [vmem:[%s1 + $0x180] sm:$0xff]
    %v83 = vld [vmem:[%s1 + $0x188] sm:$0xff]
    %v84 = vld [vmem:[%s1 + $0x190] sm:$0xff]
    %v85 = vld [vmem:[%s1 + $0x198] sm:$0xff]
    %v86 = vld [vmem:[%s1 + $0x1a0] sm:$0xff]
    %v87 = vld [vmem:[%s1 + $0x1a8] sm:$0xff]
    %v88 = vld [vmem:[%s1 + $0x1b0] sm:$0xff]
    %v89 = vld [vmem:[%s1 + $0x1b8] sm:$0xff]
    %v90 = vld [vmem:[%s1 + $0x1c0] sm:$0xff]
    %v91 = vld [vmem:[%s1 + $0x1c8] sm:$0xff]
    %v92 = vld [vmem:[%s1 + $0x1d0] sm:$0xff]
    %v93 = vld [vmem:[%s1 + $0x1d8] sm:$0xff]
    %v94 = vld [vmem:[%s1 + $0x1e0] sm:$0xff]
    %v95 = vld [vmem:[%s1 + $0x1e8] sm:$0xff]
    %v96 = vld [vmem:[%s1 + $0x1f0] sm:$0xff]
    %v97 = vld [vmem:[%s1 + $0x1f8] sm:$0xff]
    %v98 = vld [vmem:[%s1 + $0x200] sm:$0xff]
    %v99 = vld [vmem:[%s1 + $0x208] sm:$0xff]
    %v100 = vld [vmem:[%s1 + $0x210] sm:$0xff]
    %v101 = vld [vmem:[%s1 + $0x218] sm:$0xff]
    %v102 = vld [vmem:[%s1 + $0x220] sm:$0xff]
    %v103 = vld [vmem:[%s1 + $0x228] sm:$0xff]
    %v104 = vld [vmem:[%s1 + $0x230] sm:$0xff]
    %v105 = vld [vmem:[%s1 + $0x238] sm:$0xff]
    %v106 = vld [vmem:[%s1 + $0x240] sm:$0xff]
    %v107 = vld [vmem:[%s1 + $0x248] sm:$0xff]
    %v108 = vld [vmem:[%s1 + $0x250] sm:$0xff]
    %v109 = vld [vmem:[%s1 + $0x258] sm:$0xff]
    %v110 = vld [vmem:[%s1 + $0x260] sm:$0xff]
    %v111 = vld [vmem:[%s1 + $0x268] sm:$0xff]
    %v112 = vld [vmem:[%s1 + $0x270] sm:$0xff]
    %v113 = vld [vmem:[%s1 + $0x278] sm:$0xff]
    %v114 = vld [vmem:[%s1 + $0x280] sm:$0xff]
    %v115 = vld [vmem:[%s1 + $0x288] sm:$0xff]
    %v116 = vld [vmem:[%s1 + $0x290] sm:$0xff]
    %v117 = vld [vmem:[%s1 + $0x298] sm:$0xff]
    %v118 = vld [vmem:[%s1 + $0x2a0] sm:$0xff]
    %v119 = vld [vmem:[%s1 + $0x2a8] sm:$0xff]
    %v120 = vld [vmem:[%s1 + $0x2b0] sm:$0xff]
    %v121 = vld [vmem:[%s1 + $0x2b8] sm:$0xff]
    %v122 = vld [vmem:[%s1 + $0x2c0] sm:$0xff]
    %v123 = vld [vmem:[%s1 + $0x2c8] sm:$0xff]
    %v124 = vld [vmem:[%s1 + $0x2d0] sm:$0xff]
    %v125 = vld [vmem:[%s1 + $0x2d8] sm:$0xff]
    %v126 = vld [vmem:[%s1 + $0x2e0] sm:$0xff]
    %v127 = vld [vmem:[%s1 + $0x2e8] sm:$0xff]
    %v128 = vld [vmem:[%s1 + $0x2f0] sm:$0xff]
    %v129 = vld [vmem:[%s1 + $0x2f8] sm:$0xff]
    %v130 = vld [vmem:[%s1 + $0x300] sm:$0xff]
    %v131 = vld [vmem:[%s1 + $0x308] sm:$0xff]
    %v132 = vld [vmem:[%s1 + $0x310] sm:$0xff]
    %v133 = vld [vmem:[%s1 + $0x318] sm:$0xff]
    %v134 = vld [vmem:[%s1 + $0x320] sm:$0xff]
    %v135 = vld [vmem:[%s1 + $0x328] sm:$0xff]
    %v136 = vld [vmem:[%s1 + $0x330] sm:$0xff]
    %v137 = vld [vmem:[%s1 + $0x338] sm:$0xff]
    %v138 = vld [vmem:[%s1 + $0x340] sm:$0xff]
    %v139 = vld [vmem:[%s1 + $0x348] sm:$0xff]
    %v140 = vld [vmem:[%s1 + $0x350] sm:$0xff]
    %v141 = vld [vmem:[%s1 + $0x358] sm:$0xff]
    %v142 = vld [vmem:[%s1 + $0x360] sm:$0xff]
    %v143 = vld [vmem:[%s1 + $0x368] sm:$0xff]
    %v144 = vld [vmem:[%s1 + $0x370] sm:$0xff]
    %v145 = vld [vmem:[%s1 + $0x378] sm:$0xff]
    %v146 = vld [vmem:[%s2] sm:$0x1]
    %v148 = vlaneseq
    %v149 = vshrl.u32 %v148, 7
    %v150 = vsub.s32 0, %v149
    %v151 = vrot.slane %v146, %v150
    %153 = vmatprep.subr.mxu0 0.0
    %154 = vmatpush1.msra.mxu0 %v49
    %155 = vmatprep.subr.mxu0 0.0
    %156 = vmatpush1.msra.mxu0 %v48
    %157 = vmatprep.subr.mxu0 0.0
    %158 = vmatpush1.msra.mxu0 %v47
    %159 = vmatprep.subr.mxu0 0.0
    %160 = vmatpush1.msra.mxu0 %v46
    %161 = vmatprep.subr.mxu0 0.0
    %162 = vmatpush1.msra.mxu0 %v45
    %163 = vmatprep.subr.mxu0 0.0
    %164 = vmatpush1.msra.mxu0 %v44
    %165 = vmatprep.subr.mxu0 0.0
    %166 = vmatpush1.msra.mxu0 %v43
    %167 = vmatprep.subr.mxu0 0.0
    %168 = vmatpush1.msra.mxu0 %v42
    %169 = vmatprep.subr.mxu0 0.0
    %170 = vmatpush1.msra.mxu0 %v41
    %171 = vmatprep.subr.mxu0 0.0
    %172 = vmatpush1.msra.mxu0 %v40
    %173 = vmatprep.subr.mxu0 0.0
    %174 = vmatpush1.msra.mxu0 %v39
    %175 = vmatprep.subr.mxu0 0.0
    %176 = vmatpush1.msra.mxu0 %v38
    %177 = vmatprep.subr.mxu0 0.0
    %178 = vmatpush1.msra.mxu0 %v37
    %179 = vmatprep.subr.mxu0 0.0
    %180 = vmatpush1.msra.mxu0 %v36
    %181 = vmatprep.subr.mxu0 0.0
    %182 = vmatpush1.msra.mxu0 %v35
    %183 = vmatprep.subr.mxu0 0.0
    %184 = vmatpush1.msra.mxu0 %v34
    %185 = vmatprep.subr.mxu0 0.0
    %186 = vmatpush2.msra.mxu0 %v65
    %187 = vmatprep.subr.mxu0 0.0
    %188 = vmatpush2.msra.mxu0 %v64
    %189 = vmatprep.subr.mxu0 0.0
    %190 = vmatpush2.msra.mxu0 %v63
    %191 = vmatprep.subr.mxu0 0.0
    %192 = vmatpush2.msra.mxu0 %v62
    %193 = vmatprep.subr.mxu0 0.0
    %194 = vmatpush2.msra.mxu0 %v61
    %195 = vmatprep.subr.mxu0 0.0
    %196 = vmatpush2.msra.mxu0 %v60
    %197 = vmatprep.subr.mxu0 0.0
    %198 = vmatpush2.msra.mxu0 %v59
    %199 = vmatprep.subr.mxu0 0.0
    %200 = vmatpush2.msra.mxu0 %v58
    %201 = vmatprep.subr.mxu0 0.0
    %202 = vmatpush2.msra.mxu0 %v57
    %203 = vmatprep.subr.mxu0 0.0
    %204 = vmatpush2.msra.mxu0 %v56
    %205 = vmatprep.subr.mxu0 0.0
    %206 = vmatpush2.msra.mxu0 %v55
    %207 = vmatprep.subr.mxu0 0.0
    %208 = vmatpush2.msra.mxu0 %v54
    %209 = vmatprep.subr.mxu0 0.0
    %210 = vmatpush2.msra.mxu0 %v53
    %211 = vmatprep.subr.mxu0 0.0
    %212 = vmatpush2.msra.mxu0 %v52
    %213 = vmatprep.subr.mxu0 0.0
    %214 = vmatpush2.msra.mxu0 %v51
    %215 = vmatprep.subr.mxu0 0.0
    %216 = vmatpush2.msra.mxu0 %v50
    %217 = vmatprep.mubr.f32.mxu0 %v28
    %218 = vmatmul.mubr.f32.gmra.mxu0 %v27
    %v219 = vpop.f32.mrf.mxu0
    %v220 = vadd.f32 %v151, %v219
    %v221 = vpop.f32.mrf.mxu0
    %222 = vdwg.mxu0
    %223 = vmatprep.subr.mxu0 0.0
    %224 = vmatpush1.msra.mxu0 %v81
    %225 = vmatprep.subr.mxu0 0.0
    %226 = vmatpush1.msra.mxu0 %v80
    %227 = vmatprep.subr.mxu0 0.0
    %228 = vmatpush1.msra.mxu0 %v79
    %229 = vmatprep.subr.mxu0 0.0
    %230 = vmatpush1.msra.mxu0 %v78
    %231 = vmatprep.subr.mxu0 0.0
    %232 = vmatpush1.msra.mxu0 %v77
    %233 = vmatprep.subr.mxu0 0.0
    %234 = vmatpush1.msra.mxu0 %v76
    %235 = vmatprep.subr.mxu0 0.0
    %236 = vmatpush1.msra.mxu0 %v75
    %237 = vmatprep.subr.mxu0 0.0
    %238 = vmatpush1.msra.mxu0 %v74
    %239 = vmatprep.subr.mxu0 0.0
    %240 = vmatpush1.msra.mxu0 %v73
    %241 = vmatprep.subr.mxu0 0.0
    %242 = vmatpush1.msra.mxu0 %v72
    %243 = vmatprep.subr.mxu0 0.0
    %244 = vmatpush1.msra.mxu0 %v71
    %245 = vmatprep.subr.mxu0 0.0
    %246 = vmatpush1.msra.mxu0 %v70
    %247 = vmatprep.subr.mxu0 0.0
    %248 = vmatpush1.msra.mxu0 %v69
    %249 = vmatprep.subr.mxu0 0.0
    %250 = vmatpush1.msra.mxu0 %v68
    %251 = vmatprep.subr.mxu0 0.0
    %252 = vmatpush1.msra.mxu0 %v67
    %253 = vmatprep.subr.mxu0 0.0
    %254 = vmatpush1.msra.mxu0 %v66
    %255 = vmatprep.subr.mxu0 0.0
    %256 = vmatpush2.msra.mxu0 %v97
    %257 = vmatprep.subr.mxu0 0.0
    %258 = vmatpush2.msra.mxu0 %v96
    %259 = vmatprep.subr.mxu0 0.0
    %260 = vmatpush2.msra.mxu0 %v95
    %261 = vmatprep.subr.mxu0 0.0
    %262 = vmatpush2.msra.mxu0 %v94
    %263 = vmatprep.subr.mxu0 0.0
    %264 = vmatpush2.msra.mxu0 %v93
    %265 = vmatprep.subr.mxu0 0.0
    %266 = vmatpush2.msra.mxu0 %v92
    %267 = vmatprep.subr.mxu0 0.0
    %268 = vmatpush2.msra.mxu0 %v91
    %269 = vmatprep.subr.mxu0 0.0
    %270 = vmatpush2.msra.mxu0 %v90
    %271 = vmatprep.subr.mxu0 0.0
    %272 = vmatpush2.msra.mxu0 %v89
    %273 = vmatprep.subr.mxu0 0.0
    %274 = vmatpush2.msra.mxu0 %v88
    %275 = vmatprep.subr.mxu0 0.0
    %276 = vmatpush2.msra.mxu0 %v87
    %277 = vmatprep.subr.mxu0 0.0
    %278 = vmatpush2.msra.mxu0 %v86
    %279 = vmatprep.subr.mxu0 0.0
    %280 = vmatpush2.msra.mxu0 %v85
    %281 = vmatprep.subr.mxu0 0.0
    %282 = vmatpush2.msra.mxu0 %v84
    %283 = vmatprep.subr.mxu0 0.0
    %284 = vmatpush2.msra.mxu0 %v83
    %285 = vmatprep.subr.mxu0 0.0
    %286 = vmatpush2.msra.mxu0 %v82
    %287 = vmatprep.mubr.f32.mxu0 %v30
    %288 = vmatmul.mubr.f32.gmra.mxu0 %v29
    %v289 = vpop.f32.mrf.mxu0
    %v290 = vadd.f32 %v220, %v289
    %v291 = vpop.f32.mrf.mxu0
    %292 = vdwg.mxu0
    %293 = vmatprep.subr.mxu0 0.0
    %294 = vmatpush1.msra.mxu0 %v113
    %295 = vmatprep.subr.mxu0 0.0
    %296 = vmatpush1.msra.mxu0 %v112
    %297 = vmatprep.subr.mxu0 0.0
    %298 = vmatpush1.msra.mxu0 %v111
    %299 = vmatprep.subr.mxu0 0.0
    %300 = vmatpush1.msra.mxu0 %v110
    %301 = vmatprep.subr.mxu0 0.0
    %302 = vmatpush1.msra.mxu0 %v109
    %303 = vmatprep.subr.mxu0 0.0
    %304 = vmatpush1.msra.mxu0 %v108
    %305 = vmatprep.subr.mxu0 0.0
    %306 = vmatpush1.msra.mxu0 %v107
    %307 = vmatprep.subr.mxu0 0.0
    %308 = vmatpush1.msra.mxu0 %v106
    %309 = vmatprep.subr.mxu0 0.0
    %310 = vmatpush1.msra.mxu0 %v105
    %311 = vmatprep.subr.mxu0 0.0
    %312 = vmatpush1.msra.mxu0 %v104
    %313 = vmatprep.subr.mxu0 0.0
    %314 = vmatpush1.msra.mxu0 %v103
    %315 = vmatprep.subr.mxu0 0.0
    %316 = vmatpush1.msra.mxu0 %v102
    %317 = vmatprep.subr.mxu0 0.0
    %318 = vmatpush1.msra.mxu0 %v101
    %319 = vmatprep.subr.mxu0 0.0
    %320 = vmatpush1.msra.mxu0 %v100
    %321 = vmatprep.subr.mxu0 0.0
    %322 = vmatpush1.msra.mxu0 %v99
    %323 = vmatprep.subr.mxu0 0.0
    %324 = vmatpush1.msra.mxu0 %v98
    %325 = vmatprep.subr.mxu0 0.0
    %326 = vmatpush2.msra.mxu0 %v129
    %327 = vmatprep.subr.mxu0 0.0
    %328 = vmatpush2.msra.mxu0 %v128
    %329 = vmatprep.subr.mxu0 0.0
    %330 = vmatpush2.msra.mxu0 %v127
    %331 = vmatprep.subr.mxu0 0.0
    %332 = vmatpush2.msra.mxu0 %v126
    %333 = vmatprep.subr.mxu0 0.0
    %334 = vmatpush2.msra.mxu0 %v125
    %335 = vmatprep.subr.mxu0 0.0
    %336 = vmatpush2.msra.mxu0 %v124
    %337 = vmatprep.subr.mxu0 0.0
    %338 = vmatpush2.msra.mxu0 %v123
    %339 = vmatprep.subr.mxu0 0.0
    %340 = vmatpush2.msra.mxu0 %v122
    %341 = vmatprep.subr.mxu0 0.0
    %342 = vmatpush2.msra.mxu0 %v121
    %343 = vmatprep.subr.mxu0 0.0
    %344 = vmatpush2.msra.mxu0 %v120
    %345 = vmatprep.subr.mxu0 0.0
    %346 = vmatpush2.msra.mxu0 %v119
    %347 = vmatprep.subr.mxu0 0.0
    %348 = vmatpush2.msra.mxu0 %v118
    %349 = vmatprep.subr.mxu0 0.0
    %350 = vmatpush2.msra.mxu0 %v117
    %351 = vmatprep.subr.mxu0 0.0
    %352 = vmatpush2.msra.mxu0 %v116
    %353 = vmatprep.subr.mxu0 0.0
    %354 = vmatpush2.msra.mxu0 %v115
    %355 = vmatprep.subr.mxu0 0.0
    %356 = vmatpush2.msra.mxu0 %v114
    %357 = vmatprep.mubr.f32.mxu0 %v32
    %358 = vmatmul.mubr.f32.gmra.mxu0 %v31
    %v359 = vpop.f32.mrf.mxu0
    %v360 = vadd.f32 %v290, %v359
    %v361 = vpop.f32.mrf.mxu0
    %362 = vdwg.mxu0
    %363 = vmatprep.subr.mxu0 0.0
    %364 = vmatpush1.msra.mxu0 %v145
    %365 = vmatprep.subr.mxu0 0.0
    %366 = vmatpush1.msra.mxu0 %v144
    %367 = vmatprep.subr.mxu0 0.0
    %368 = vmatpush1.msra.mxu0 %v143
    %369 = vmatprep.subr.mxu0 0.0
    %370 = vmatpush1.msra.mxu0 %v142
    %371 = vmatprep.subr.mxu0 0.0
    %372 = vmatpush1.msra.mxu0 %v141
    %373 = vmatprep.subr.mxu0 0.0
    %374 = vmatpush1.msra.mxu0 %v140
    %375 = vmatprep.subr.mxu0 0.0
    %376 = vmatpush1.msra.mxu0 %v139
    %377 = vmatprep.subr.mxu0 0.0
    %378 = vmatpush1.msra.mxu0 %v138
    %379 = vmatprep.subr.mxu0 0.0
    %380 = vmatpush1.msra.mxu0 %v137
    %381 = vmatprep.subr.mxu0 0.0
    %382 = vmatpush1.msra.mxu0 %v136
    %383 = vmatprep.subr.mxu0 0.0
    %384 = vmatpush1.msra.mxu0 %v135
    %385 = vmatprep.subr.mxu0 0.0
    %386 = vmatpush1.msra.mxu0 %v134
    %387 = vmatprep.subr.mxu0 0.0
    %388 = vmatpush1.msra.mxu0 %v133
    %389 = vmatprep.subr.mxu0 0.0
    %390 = vmatpush1.msra.mxu0 %v132
    %391 = vmatprep.subr.mxu0 0.0
    %392 = vmatpush1.msra.mxu0 %v131
    %393 = vmatprep.subr.mxu0 0.0
    %394 = vmatpush1.msra.mxu0 %v130
    %395 = vmatprep.subr.mxu0 0.0
    %396 = vmatpush2.msra.mxu0 0.0
    %397 = vmatprep.subr.mxu0 0.0
    %398 = vmatpush2.msra.mxu0 0.0
    %399 = vmatprep.subr.mxu0 0.0
    %400 = vmatpush2.msra.mxu0 0.0
    %401 = vmatprep.subr.mxu0 0.0
    %402 = vmatpush2.msra.mxu0 0.0
    %403 = vmatprep.subr.mxu0 0.0
    %404 = vmatpush2.msra.mxu0 0.0
    %405 = vmatprep.subr.mxu0 0.0
    %406 = vmatpush2.msra.mxu0 0.0
    %407 = vmatprep.subr.mxu0 0.0
    %408 = vmatpush2.msra.mxu0 0.0
    %409 = vmatprep.subr.mxu0 0.0
    %410 = vmatpush2.msra.mxu0 0.0
    %411 = vmatprep.subr.mxu0 0.0
    %412 = vmatpush2.msra.mxu0 0.0
    %413 = vmatprep.subr.mxu0 0.0
    %414 = vmatpush2.msra.mxu0 0.0
    %415 = vmatprep.subr.mxu0 0.0
    %416 = vmatpush2.msra.mxu0 0.0
    %417 = vmatprep.subr.mxu0 0.0
    %418 = vmatpush2.msra.mxu0 0.0
    %419 = vmatprep.subr.mxu0 0.0
    %420 = vmatpush2.msra.mxu0 0.0
    %421 = vmatprep.subr.mxu0 0.0
    %422 = vmatpush2.msra.mxu0 0.0
    %423 = vmatprep.subr.mxu0 0.0
    %424 = vmatpush2.msra.mxu0 0.0
    %425 = vmatprep.subr.mxu0 0.0
    %426 = vmatpush2.msra.mxu0 0.0
    %427 = vmatprep.mubr.f32.mxu0 0.0
    %428 = vmatmul.mubr.f32.gmra.mxu0 %v33
    %v429 = vpop.f32.mrf.mxu0
    %v430 = vadd.f32 %v360, %v429
    %v431 = vpop.f32.mrf.mxu0
    %432 = vdwg.mxu0
    %v433 = vxor.u32 %v430, 2147483648
    %v434 = vmul.f32 %v433, 1.442695
    %v435 = vpow.pop %v434
    %v436 = vadd.f32 %v435, 1.0
    %v437 = vrcp.pop %v436
    %v438 = vmul.f32 1.0, %v437
    %v439 = vld [vmem:[%s3] sm:$0xff]
    %v440 = vld [vmem:[%s3 + $0x8] sm:$0xff]
    %v441 = vld [vmem:[%s3 + $0x10] sm:$0xff]
    %v442 = vld [vmem:[%s3 + $0x18] sm:$0xff]
    %v443 = vld [vmem:[%s4] sm:$0x1]
    %v445 = vlaneseq
    %v446 = vshrl.u32 %v445, 7
    %v447 = vsub.s32 0, %v446
    %v448 = vrot.slane %v443, %v447
    %vm450 = vcmask 261120
    %v452 = vsel %vm450, %v438, 0
    %454 = vmatprep.subr.mxu0 0.0
    %455 = vmatpush1.msra.mxu0 0.0
    %456 = vmatprep.subr.mxu0 0.0
    %457 = vmatpush1.msra.mxu0 0.0
    %458 = vmatprep.subr.mxu0 0.0
    %459 = vmatpush1.msra.mxu0 0.0
    %460 = vmatprep.subr.mxu0 0.0
    %461 = vmatpush1.msra.mxu0 0.0
    %462 = vmatprep.subr.mxu0 0.0
    %463 = vmatpush1.msra.mxu0 0.0
    %464 = vmatprep.subr.mxu0 0.0
    %465 = vmatpush1.msra.mxu0 0.0
    %466 = vmatprep.subr.mxu0 0.0
    %467 = vmatpush1.msra.mxu0 0.0
    %468 = vmatprep.subr.mxu0 0.0
    %469 = vmatpush1.msra.mxu0 0.0
    %470 = vmatprep.subr.mxu0 0.0
    %471 = vmatpush1.msra.mxu0 0.0
    %472 = vmatprep.subr.mxu0 0.0
    %473 = vmatpush1.msra.mxu0 0.0
    %474 = vmatprep.subr.mxu0 0.0
    %475 = vmatpush1.msra.mxu0 0.0
    %476 = vmatprep.subr.mxu0 0.0
    %477 = vmatpush1.msra.mxu0 0.0
    %478 = vmatprep.subr.mxu0 0.0
    %479 = vmatpush1.msra.mxu0 %v442
    %480 = vmatprep.subr.mxu0 0.0
    %481 = vmatpush1.msra.mxu0 %v441
    %482 = vmatprep.subr.mxu0 0.0
    %483 = vmatpush1.msra.mxu0 %v440
    %484 = vmatprep.subr.mxu0 0.0
    %485 = vmatpush1.msra.mxu0 %v439
    %486 = vmatprep.subr.mxu0 0.0
    %487 = vmatpush2.msra.mxu0 0.0
    %488 = vmatprep.subr.mxu0 0.0
    %489 = vmatpush2.msra.mxu0 0.0
    %490 = vmatprep.subr.mxu0 0.0
    %491 = vmatpush2.msra.mxu0 0.0
    %492 = vmatprep.subr.mxu0 0.0
    %493 = vmatpush2.msra.mxu0 0.0
    %494 = vmatprep.subr.mxu0 0.0
    %495 = vmatpush2.msra.mxu0 0.0
    %496 = vmatprep.subr.mxu0 0.0
    %497 = vmatpush2.msra.mxu0 0.0
    %498 = vmatprep.subr.mxu0 0.0
    %499 = vmatpush2.msra.mxu0 0.0
    %500 = vmatprep.subr.mxu0 0.0
    %501 = vmatpush2.msra.mxu0 0.0
    %502 = vmatprep.subr.mxu0 0.0
    %503 = vmatpush2.msra.mxu0 0.0
    %504 = vmatprep.subr.mxu0 0.0
    %505 = vmatpush2.msra.mxu0 0.0
    %506 = vmatprep.subr.mxu0 0.0
    %507 = vmatpush2.msra.mxu0 0.0
    %508 = vmatprep.subr.mxu0 0.0
    %509 = vmatpush2.msra.mxu0 0.0
    %510 = vmatprep.subr.mxu0 0.0
    %511 = vmatpush2.msra.mxu0 0.0
    %512 = vmatprep.subr.mxu0 0.0
    %513 = vmatpush2.msra.mxu0 0.0
    %514 = vmatprep.subr.mxu0 0.0
    %515 = vmatpush2.msra.mxu0 0.0
    %516 = vmatprep.subr.mxu0 0.0
    %517 = vmatpush2.msra.mxu0 0.0
    %518 = vmatprep.mubr.f32.mxu0 0.0
    %519 = vmatmul.mubr.f32.gmra.mxu0 %v452
    %v520 = vpop.f32.mrf.mxu0
    %v521 = vadd.f32 %v448, %v520
    %v522 = vpop.f32.mrf.mxu0
    %523 = vdwg.mxu0
    %v524 = vxor.u32 %v521, 2147483648
    %v525 = vmul.f32 %v524, 1.442695
    %v526 = vpow.pop %v525
    %v527 = vadd.f32 %v526, 1.0
    %v528 = vrcp.pop %v527
    %v529 = vmul.f32 1.0, %v528
    %v530 = vld [vmem:[%s5] sm:$0xff]
    %v531 = vld [vmem:[%s5 + $0x8] sm:$0xff]
    %v532 = vld [vmem:[%s5 + $0x10] sm:$0xff]
    %v533 = vld [vmem:[%s5 + $0x18] sm:$0xff]
    %v534 = vld [vmem:[%s6] sm:$0x1]
    %v536 = vlaneseq
    %v537 = vshrl.u32 %v536, 7
    %v538 = vsub.s32 0, %v537
    %v539 = vrot.slane %v534, %v538
    %v542 = vsel %vm450, %v529, 0
    %544 = vmatprep.subr.mxu0 0.0
    %545 = vmatpush1.msra.mxu0 0.0
    %546 = vmatprep.subr.mxu0 0.0
    %547 = vmatpush1.msra.mxu0 0.0
    %548 = vmatprep.subr.mxu0 0.0
    %549 = vmatpush1.msra.mxu0 0.0
    %550 = vmatprep.subr.mxu0 0.0
    %551 = vmatpush1.msra.mxu0 0.0
    %552 = vmatprep.subr.mxu0 0.0
    %553 = vmatpush1.msra.mxu0 0.0
    %554 = vmatprep.subr.mxu0 0.0
    %555 = vmatpush1.msra.mxu0 0.0
    %556 = vmatprep.subr.mxu0 0.0
    %557 = vmatpush1.msra.mxu0 0.0
    %558 = vmatprep.subr.mxu0 0.0
    %559 = vmatpush1.msra.mxu0 0.0
    %560 = vmatprep.subr.mxu0 0.0
    %561 = vmatpush1.msra.mxu0 0.0
    %562 = vmatprep.subr.mxu0 0.0
    %563 = vmatpush1.msra.mxu0 0.0
    %564 = vmatprep.subr.mxu0 0.0
    %565 = vmatpush1.msra.mxu0 0.0
    %566 = vmatprep.subr.mxu0 0.0
    %567 = vmatpush1.msra.mxu0 0.0
    %568 = vmatprep.subr.mxu0 0.0
    %569 = vmatpush1.msra.mxu0 %v533
    %570 = vmatprep.subr.mxu0 0.0
    %571 = vmatpush1.msra.mxu0 %v532
    %572 = vmatprep.subr.mxu0 0.0
    %573 = vmatpush1.msra.mxu0 %v531
    %574 = vmatprep.subr.mxu0 0.0
    %575 = vmatpush1.msra.mxu0 %v530
    %576 = vmatprep.subr.mxu0 0.0
    %577 = vmatpush2.msra.mxu0 0.0
    %578 = vmatprep.subr.mxu0 0.0
    %579 = vmatpush2.msra.mxu0 0.0
    %580 = vmatprep.subr.mxu0 0.0
    %581 = vmatpush2.msra.mxu0 0.0
    %582 = vmatprep.subr.mxu0 0.0
    %583 = vmatpush2.msra.mxu0 0.0
    %584 = vmatprep.subr.mxu0 0.0
    %585 = vmatpush2.msra.mxu0 0.0
    %586 = vmatprep.subr.mxu0 0.0
    %587 = vmatpush2.msra.mxu0 0.0
    %588 = vmatprep.subr.mxu0 0.0
    %589 = vmatpush2.msra.mxu0 0.0
    %590 = vmatprep.subr.mxu0 0.0
    %591 = vmatpush2.msra.mxu0 0.0
    %592 = vmatprep.subr.mxu0 0.0
    %593 = vmatpush2.msra.mxu0 0.0
    %594 = vmatprep.subr.mxu0 0.0
    %595 = vmatpush2.msra.mxu0 0.0
    %596 = vmatprep.subr.mxu0 0.0
    %597 = vmatpush2.msra.mxu0 0.0
    %598 = vmatprep.subr.mxu0 0.0
    %599 = vmatpush2.msra.mxu0 0.0
    %600 = vmatprep.subr.mxu0 0.0
    %601 = vmatpush2.msra.mxu0 0.0
    %602 = vmatprep.subr.mxu0 0.0
    %603 = vmatpush2.msra.mxu0 0.0
    %604 = vmatprep.subr.mxu0 0.0
    %605 = vmatpush2.msra.mxu0 0.0
    %606 = vmatprep.subr.mxu0 0.0
    %607 = vmatpush2.msra.mxu0 0.0
    %608 = vmatprep.mubr.f32.mxu0 0.0
    %609 = vmatmul.mubr.f32.gmra.mxu0 %v542
    %v610 = vpop.f32.mrf.mxu0
    %v611 = vadd.f32 %v539, %v610
    %v612 = vpop.f32.mrf.mxu0
    %613 = vdwg.mxu0
    %v614 = vlaneseq
    %v615 = vand.u32 %v614, 127
    %vm616 = vcmp.lt.s32.totalorder %v615, 10
    %v617 = vsel %vm616, %v611, -inf
    %618 = vmax.xlane.f32.xlu0 %v617
    %v619 = vpop.xlane.xlu0 %618
    %v620 = vsub.f32 %v617, %v619
    %v621 = vmul.f32 %v620, 1.442695
    %v622 = vpow.pop %v621
    %623 = vadd.xlane.f32.xlu0 %v622
    %v624 = vpop.xlane.xlu0 %623
    %v625 = vlog2.pop %v624
    %v626 = vmul.f32 %v625, 0.6931472
    %v627 = vsub.f32 %v620, %v626
    %628 = vst [vmem:[#allocation2] sm:$0xff] %v627
    // Predicated region
    $region30: #{tpu_custom_call.1} parent=1 // pred_check
      _
    $region31: #{tpu_custom_call.1} parent=1 // pred_check_branch
      %630 = sbr.rel (0) target = $region33
    $region32: #{tpu_custom_call.1} parent=1 // pred_region
      %s632 = ssub.s32 128, 128
      %633 = vsyncadd [#allocation3], %s632
      %s635 = sshll.u32 [#allocation2], 4
      %s636 = int_to_ptr.vmem [resolvable:$true] %s635
      %638 = dma.vmem_to_hbm [thread:$0]  %s636, 128, %s7, [#allocation3]
    $region33: #{tpu_custom_call.1} parent=1 // pred_fallthru
      _
    // Predicated region
    $region34: #{tpu_custom_call.1} parent=1 // pred_check
      _
    $region35: #{tpu_custom_call.1} parent=1 // pred_check_branch
      %640 = sbr.rel (0) target = $region37
    $region36: #{tpu_custom_call.1} parent=1 // pred_region
      %641 = dma.done [#allocation3], 128
    $region37: #{tpu_custom_call.1} parent=1 // pred_fallthru
      _
    %642 = vsyncpa [#allocation3], 1

</llo_original>
